<compile_context>
chip_gen: v7x
topology: tpu7x:2x2x1
jax: 0.10.0
libtpu: 0.0.40
codegen_flags: <defaults>
</compile_context>

<pallas_src>
import functools
import math

import jax
import jax.numpy as jnp
from jax.experimental import pallas as pl
from jax.experimental.pallas import tpu as pltpu

EPS = 1e-6


def _round_up(a, m):
    return ((a + m - 1) // m) * m


def _vmem_capacity_bytes():
    try:
        return int(pltpu.get_tpu_info().vmem_capacity_bytes)
    except Exception:
        return 64 * 1024 * 1024  # conservative (v7x per-core VMEM)


def _transformer_layer_kernel(hv_ref, he_ref, ma_ref, mv_ref,
                              wq_ref, wkv_ref, wo_ref,
                              wi_ref, bi_ref, wout_ref, bo_ref,
                              g0_ref, b0_ref, g1_ref, b1_ref,
                              gsel_ref, ssel_ref,
                              o_ref, *, num_neighbors, compute_dtype):
    R, H = o_ref.shape               # rows in this tile, hidden
    K = num_neighbors

    c = lambda a: a.astype(compute_dtype)   # matmul-input dtype (f32 or bf16)

    hv = hv_ref[...]                 # [R, H]
    he = he_ref[...]                 # [R*K, C]
    mask = ma_ref[...]               # [R, K]

    # --- NeighborAttention projections (MXU). K|V fused: one pass over h_E. --
    q = jnp.dot(c(hv), c(wq_ref[...]), preferred_element_type=jnp.float32)    # [R, H]
    kv = jnp.dot(c(he), c(wkv_ref[...]), preferred_element_type=jnp.float32)  # [R*K, 2H]
    kp = kv[:, :H]
    vp = kv[:, H:]

    kh = kp.reshape(R, K, H)         # leading-dim split only (lane-dense H)
    qk = (q[:, None, :] * kh).reshape(R * K, H)

    # Per-head logit reduction as a matmul with a padded (128-col) selector
    # that already carries the 1/sqrt(d) scale (built on the host).
    logits = jnp.dot(qk, gsel_ref[...],
                     preferred_element_type=jnp.float32)          # [R*K, NHP]
    nhp = logits.shape[-1]
    logits = logits.reshape(R, K, nhp)

    # --- masked softmax over K ----------------------------------------------
    # NOTE: neg_inf must stay finfo(f32).min (NOT -inf) so fully-masked rows
    # give exp(min - min) = exp(0) = 1 instead of NaN; mask-multiply zeros them.
    neg_inf = jnp.finfo(jnp.float32).min
    m3 = mask[:, :, None]                                         # [R, K, 1]
    logits = jnp.where(m3 > 0, logits, neg_inf)
    lmax = jnp.max(logits, axis=1, keepdims=True)
    e = jnp.exp(logits - lmax)
    ssum = jnp.sum(e, axis=1, keepdims=True)
    attend = m3 * (e * pl.reciprocal(ssum, approx=True))          # [R, K, NHP]

    # --- head -> hidden expansion (contraction padded to 128) + V-sum over K -
    attend_full = jnp.dot(attend.reshape(R * K, nhp), ssel_ref[...],
                          preferred_element_type=jnp.float32)     # [R*K, H]
    upd = (attend_full * vp).reshape(R, K, H).sum(axis=1)         # [R, H]
    dh = jnp.dot(c(upd), c(wo_ref[...]), preferred_element_type=jnp.float32)

    # --- Normalize (PyTorch unbiased var /(H-1); eps inside sqrt AND on sigma)
    def norm(x, gain, bias):
        mu = jnp.mean(x, axis=-1, keepdims=True)
        var = jnp.sum((x - mu) ** 2, axis=-1, keepdims=True) * (1.0 / (H - 1))
        sigma = jnp.sqrt(var + EPS)
        # exact division (approx reciprocal would drift the 2e-3 f32 check)
        return gain * (x - mu) / (sigma + EPS) + bias

    # TODO(synk): nn.Dropout has no deterministic Pallas equivalent; identity (eval mode).
    x = norm(hv.astype(jnp.float32) + dh, g0_ref[...], b0_ref[...])

    # --- PositionWiseFeedForward ---------------------------------------------
    hff = jnp.maximum(
        jnp.dot(c(x), c(wi_ref[...]), preferred_element_type=jnp.float32)
        + bi_ref[...], 0.0)
    dh2 = jnp.dot(c(hff), c(wout_ref[...]),
                  preferred_element_type=jnp.float32) + bo_ref[...]

    y = norm(x + dh2, g1_ref[...], b1_ref[...])

    # --- node mask ------------------------------------------------------------
    o_ref[...] = (y * mv_ref[...]).astype(o_ref.dtype)            # mv_ref: [R, 1]


def transformer_layer(h_V, h_E, mask_V, mask_attend, params, num_heads=4,
                      row_tile=None, compute_dtype=jnp.float32):
    B, N, H = h_V.shape
    _, _, K, C = h_E.shape
    R = B * N
    d = H // num_heads

    # Chip-aware VMEM budget / default tile: v7x has only 64 MiB per core.
    vmem_cap = _vmem_capacity_bytes()
    big_vmem = vmem_cap >= 100 * 1024 * 1024          # v5e / v6e (128 MiB)
    vmem_limit = (64 if big_vmem else 48) * 1024 * 1024
    if row_tile is None:
        row_tile = 512 if big_vmem else 128

    # Keep >= 2 grid steps when possible (two v7x TensorCores / pipeline overlap).
    row_tile = min(row_tile, _round_up(max((R + 1) // 2, 8), 8))
    row_tile = _round_up(max(row_tile, 8), 8)
    R_pad = _round_up(R, row_tile)
    num_tiles = R_pad // row_tile
    pad = R_pad - R

    hv_flat = h_V.reshape(R, H)
    he_flat = h_E.reshape(R * K, C)
    ma_flat = mask_attend.reshape(R, K).astype(jnp.float32)
    mv_flat = mask_V.reshape(R, 1).astype(jnp.float32)

    # Fused K|V projection weight (one matmul over h_E, the largest operand).
    wq, wo, wi, wout = params["wq"], params["wo"], params["wi"], params["wout"]
    wkv = jnp.concatenate([params["wk"], params["wv"]], axis=1)   # [C, 2H]

    if compute_dtype != jnp.float32:
        # bf16 at the boundary: halves HBM->VMEM DMA for h_E and runs the big
        # matmuls at native bf16 MXU rate (f32 accumulation in-kernel).
        hv_flat = hv_flat.astype(compute_dtype)
        he_flat = he_flat.astype(compute_dtype)
        wq, wkv = wq.astype(compute_dtype), wkv.astype(compute_dtype)
        wo, wi, wout = (wo.astype(compute_dtype), wi.astype(compute_dtype),
                        wout.astype(compute_dtype))

    if pad:
        hv_flat = jnp.pad(hv_flat, ((0, pad), (0, 0)))
        he_flat = jnp.pad(he_flat, ((0, pad * K), (0, 0)))
        ma_flat = jnp.pad(ma_flat, ((0, pad), (0, 0)))
        mv_flat = jnp.pad(mv_flat, ((0, pad), (0, 0)))

    # Head-selector matrices, hoisted out of the kernel body and padded to a
    # full 128-lane head axis (full MXU tiles, unmasked stores).  The 1/sqrt(d)
    # logit scale is folded into the gather selector.
    nh_pad = _round_up(max(num_heads, 128), 128)
    scale = 1.0 / math.sqrt(d)
    ch = jnp.arange(H, dtype=jnp.int32) // d            # head id of each channel
    hh = jnp.arange(nh_pad, dtype=jnp.int32)
    gather_sel = jnp.where(ch[:, None] == hh[None, :], scale, 0.0).astype(jnp.float32)
    scatter_sel = jnp.where(hh[:, None] == ch[None, :], 1.0, 0.0).astype(jnp.float32)

    param_inputs = (wq, wkv, wo, wi, params["bi"], wout, params["bo"],
                    params["g0"], params["b0"], params["g1"], params["b1"],
                    gather_sel, scatter_sel)

    in_specs = [
        pl.BlockSpec((row_tile, H), lambda i: (i, 0)),        # h_V rows
        pl.BlockSpec((row_tile * K, C), lambda i: (i, 0)),    # h_E rows (K edges/row)
        pl.BlockSpec((row_tile, K), lambda i: (i, 0)),        # mask_attend
        pl.BlockSpec((row_tile, 1), lambda i: (i, 0)),        # mask_V
    ]
    # Grid-invariant parameters (constant index_map -> DMA'd once).  A further
    # VMEM saving would be single-buffering them via pipeline_mode=pl.Buffered(1).
    in_specs += [pl.BlockSpec(tuple(p.shape), lambda i: (0, 0)) for p in param_inputs]

    kernel = functools.partial(_transformer_layer_kernel,
                               num_neighbors=K,
                               compute_dtype=compute_dtype)

    out_flat = pl.pallas_call(
        kernel,
        grid=(num_tiles,),
        in_specs=in_specs,
        out_specs=pl.BlockSpec((row_tile, H), lambda i: (i, 0)),
        out_shape=jax.ShapeDtypeStruct((R_pad, H), jnp.float32),
        compiler_params=pltpu.CompilerParams(
            dimension_semantics=("parallel",),
            vmem_limit_bytes=vmem_limit),
    )(hv_flat, he_flat, ma_flat, mv_flat, *param_inputs)

    return out_flat[:R].reshape(B, N, H)


def transformer_layer_reference(h_V, h_E, mask_V, mask_attend, p, num_heads=4):
    """Pure-JAX mirror of the PyTorch forward (eval mode)."""
    B, N, H = h_V.shape
    K = h_E.shape[2]
    d = H // num_heads
    q = h_V @ p["wq"]
    kp = h_E @ p["wk"]
    vp = h_E @ p["wv"]
    qh = q.reshape(B, N, num_heads, d)
    kh = kp.reshape(B, N, K, num_heads, d)
    vh = vp.reshape(B, N, K, num_heads, d)
    logits = jnp.einsum("bnhd,bnkhd->bnhk", qh, kh) / jnp.sqrt(jnp.float32(d))
    mask = mask_attend[:, :, None, :]
    logits = jnp.where(mask > 0, logits, jnp.finfo(jnp.float32).min)
    attend = jax.nn.softmax(logits, axis=-1) * mask
    upd = jnp.einsum("bnhk,bnkhd->bnhd", attend, vh).reshape(B, N, H)
    dh = upd @ p["wo"]

    def norm(x, g, b):
        mu = x.mean(-1, keepdims=True)
        var = jnp.sum((x - mu) ** 2, -1, keepdims=True) / (H - 1)
        sig = jnp.sqrt(var + EPS)
        return g * (x - mu) / (sig + EPS) + b

    x = norm(h_V + dh, p["g0"], p["b0"])
    dh2 = jnp.maximum(x @ p["wi"] + p["bi"], 0.0) @ p["wout"] + p["bo"]
    y = norm(x + dh2, p["g1"], p["b1"])
    return y * mask_V[..., None]


if __name__ == "__main__":
    B, N, K = 2, 8, 4          # batch, nodes, neighbors
    H, C = 32, 64              # num_hidden, num_in
    num_heads = 4

    key = jax.random.PRNGKey(0)
    keys = jax.random.split(key, 12)

    h_V = jax.random.normal(keys[0], (B, N, H), dtype=jnp.float32)
    h_E = jax.random.normal(keys[1], (B, N, K, C), dtype=jnp.float32)
    mask_attend = (jax.random.uniform(keys[2], (B, N, K)) > 0.3).astype(jnp.float32)
    mask_V = (jax.random.uniform(keys[3], (B, N)) > 0.2).astype(jnp.float32)

    s = 0.1
    params = {
        "wq": s * jax.random.normal(keys[4], (H, H), dtype=jnp.float32),
        "wk": s * jax.random.normal(keys[5], (C, H), dtype=jnp.float32),
        "wv": s * jax.random.normal(keys[6], (C, H), dtype=jnp.float32),
        "wo": s * jax.random.normal(keys[7], (H, H), dtype=jnp.float32),
        "wi": s * jax.random.normal(keys[8], (H, 4 * H), dtype=jnp.float32),
        "bi": s * jax.random.normal(keys[9], (1, 4 * H), dtype=jnp.float32),
        "wout": s * jax.random.normal(keys[10], (4 * H, H), dtype=jnp.float32),
        "bo": s * jax.random.normal(keys[11], (1, H), dtype=jnp.float32),
        "g0": jnp.ones((1, H), dtype=jnp.float32),
        "b0": jnp.zeros((1, H), dtype=jnp.float32),
        "g1": jnp.ones((1, H), dtype=jnp.float32),
        "b1": jnp.zeros((1, H), dtype=jnp.float32),
    }

    # row_tile auto-selects from VMEM capacity and is capped so the tiny test
    # still gets a 2-step "parallel" grid (row_tile=8 here); production keeps
    # 128-512 row tiles.  compute_dtype=jnp.bfloat16 is the v6e/v7x fast path.
    out = transformer_layer(h_V, h_E, mask_V, mask_attend, params,
                            num_heads=num_heads)
    out = jax.block_until_ready(out)

    ref = transformer_layer_reference(h_V, h_E, mask_V, mask_attend, params, num_heads)
    ref = jax.block_until_ready(ref)

    assert out.shape == (B, N, H)
    assert jnp.allclose(out, ref, atol=2e-3, rtol=2e-3), "mismatch vs reference"
    print("KERNEL_OK")
</pallas_src>

<mosaic_0001>
module attributes {stable_mosaic.version = 11 : i64} {
  func.func @_transformer_layer_kernel(%arg0: i32, %arg1: memref<8x32xf32, #tpu.memory_space<vmem>>, %arg2: memref<32x64xf32, #tpu.memory_space<vmem>>, %arg3: memref<8x4xf32, #tpu.memory_space<vmem>>, %arg4: memref<8x1xf32, #tpu.memory_space<vmem>>, %arg5: memref<32x32xf32, #tpu.memory_space<vmem>>, %arg6: memref<64x64xf32, #tpu.memory_space<vmem>>, %arg7: memref<32x32xf32, #tpu.memory_space<vmem>>, %arg8: memref<32x128xf32, #tpu.memory_space<vmem>>, %arg9: memref<1x128xf32, #tpu.memory_space<vmem>>, %arg10: memref<128x32xf32, #tpu.memory_space<vmem>>, %arg11: memref<1x32xf32, #tpu.memory_space<vmem>>, %arg12: memref<1x32xf32, #tpu.memory_space<vmem>>, %arg13: memref<1x32xf32, #tpu.memory_space<vmem>>, %arg14: memref<1x32xf32, #tpu.memory_space<vmem>>, %arg15: memref<1x32xf32, #tpu.memory_space<vmem>>, %arg16: memref<32x128xf32, #tpu.memory_space<vmem>>, %arg17: memref<128x32xf32, #tpu.memory_space<vmem>>, %arg18: memref<8x32xf32, #tpu.memory_space<vmem>>) attributes {dimension_semantics = [#tpu.dimension_semantics<parallel>], iteration_bounds = array<i64: 2>, scalar_prefetch = 0 : i64, scratch_operands = 0 : i64, tpu.core_type = #tpu.core_type<tc>, window_params = [{transform_indices = @transform_0, window_bounds = array<i64: 8, 32>}, {transform_indices = @transform_1, window_bounds = array<i64: 32, 64>}, {transform_indices = @transform_2, window_bounds = array<i64: 8, 4>}, {transform_indices = @transform_3, window_bounds = array<i64: 8, 1>}, {pipeline_mode = #tpu.pipeline_mode<synchronous>, transform_indices = @transform_4, window_bounds = array<i64: 32, 32>}, {pipeline_mode = #tpu.pipeline_mode<synchronous>, transform_indices = @transform_5, window_bounds = array<i64: 64, 64>}, {pipeline_mode = #tpu.pipeline_mode<synchronous>, transform_indices = @transform_6, window_bounds = array<i64: 32, 32>}, {pipeline_mode = #tpu.pipeline_mode<synchronous>, transform_indices = @transform_7, window_bounds = array<i64: 32, 128>}, {pipeline_mode = #tpu.pipeline_mode<synchronous>, transform_indices = @transform_8, window_bounds = array<i64: 1, 128>}, {pipeline_mode = #tpu.pipeline_mode<synchronous>, transform_indices = @transform_9, window_bounds = array<i64: 128, 32>}, {pipeline_mode = #tpu.pipeline_mode<synchronous>, transform_indices = @transform_10, window_bounds = array<i64: 1, 32>}, {pipeline_mode = #tpu.pipeline_mode<synchronous>, transform_indices = @transform_11, window_bounds = array<i64: 1, 32>}, {pipeline_mode = #tpu.pipeline_mode<synchronous>, transform_indices = @transform_12, window_bounds = array<i64: 1, 32>}, {pipeline_mode = #tpu.pipeline_mode<synchronous>, transform_indices = @transform_13, window_bounds = array<i64: 1, 32>}, {pipeline_mode = #tpu.pipeline_mode<synchronous>, transform_indices = @transform_14, window_bounds = array<i64: 1, 32>}, {pipeline_mode = #tpu.pipeline_mode<synchronous>, transform_indices = @transform_15, window_bounds = array<i64: 32, 128>}, {pipeline_mode = #tpu.pipeline_mode<synchronous>, transform_indices = @transform_16, window_bounds = array<i64: 128, 32>}, {transform_indices = @transform_17, window_bounds = array<i64: 8, 32>}]} {
    %c0 = arith.constant 0 : index
    %c0_0 = arith.constant 0 : index
    %0 = vector.load %arg1[%c0, %c0_0] : memref<8x32xf32, #tpu.memory_space<vmem>>, vector<8x32xf32>
    %c0_1 = arith.constant 0 : index
    %c0_2 = arith.constant 0 : index
    %1 = vector.load %arg2[%c0_1, %c0_2] : memref<32x64xf32, #tpu.memory_space<vmem>>, vector<32x64xf32>
    %c0_3 = arith.constant 0 : index
    %c0_4 = arith.constant 0 : index
    %2 = vector.load %arg3[%c0_3, %c0_4] : memref<8x4xf32, #tpu.memory_space<vmem>>, vector<8x4xf32>
    %c0_5 = arith.constant 0 : index
    %c0_6 = arith.constant 0 : index
    %3 = vector.load %arg5[%c0_5, %c0_6] : memref<32x32xf32, #tpu.memory_space<vmem>>, vector<32x32xf32>
    %cst = arith.constant dense<0.000000e+00> : vector<8x32xf32>
    %4 = tpu.matmul %0, %3, %cst {dimension_numbers = #tpu.dot_dimension_numbers<[1], [0], [0], [1], [0, 0, 1, 1], [], []>} : vector<8x32xf32>, vector<32x32xf32>, vector<8x32xf32> -> vector<8x32xf32>
    %c0_7 = arith.constant 0 : index
    %c0_8 = arith.constant 0 : index
    %5 = vector.load %arg6[%c0_7, %c0_8] : memref<64x64xf32, #tpu.memory_space<vmem>>, vector<64x64xf32>
    %cst_9 = arith.constant dense<0.000000e+00> : vector<32x64xf32>
    %6 = tpu.matmul %1, %5, %cst_9 {dimension_numbers = #tpu.dot_dimension_numbers<[1], [0], [0], [1], [0, 0, 1, 1], [], []>} : vector<32x64xf32>, vector<64x64xf32>, vector<32x64xf32> -> vector<32x64xf32>
    %7 = vector.extract_strided_slice %6 {offsets = [0, 0], sizes = [32, 32], strides = [1, 1]} : vector<32x64xf32> to vector<32x32xf32>
    %8 = vector.extract_strided_slice %6 {offsets = [0, 32], sizes = [32, 32], strides = [1, 1]} : vector<32x64xf32> to vector<32x32xf32>
    %9 = vector.shape_cast %7 : vector<32x32xf32> to vector<8x4x32xf32>
    %10 = vector.shape_cast %4 : vector<8x32xf32> to vector<8x1x32xf32>
    %11 = vector.broadcast %10 : vector<8x1x32xf32> to vector<8x4x32xf32>
    %12 = arith.mulf %11, %9 : vector<8x4x32xf32>
    %13 = vector.shape_cast %12 : vector<8x4x32xf32> to vector<32x32xf32>
    %c0_10 = arith.constant 0 : index
    %c0_11 = arith.constant 0 : index
    %14 = vector.load %arg16[%c0_10, %c0_11] : memref<32x128xf32, #tpu.memory_space<vmem>>, vector<32x128xf32>
    %cst_12 = arith.constant dense<0.000000e+00> : vector<32x128xf32>
    %15 = tpu.matmul %13, %14, %cst_12 {dimension_numbers = #tpu.dot_dimension_numbers<[1], [0], [0], [1], [0, 0, 1, 1], [], []>} : vector<32x32xf32>, vector<32x128xf32>, vector<32x128xf32> -> vector<32x128xf32>
    %16 = vector.shape_cast %15 : vector<32x128xf32> to vector<8x4x128xf32>
    %17 = vector.shape_cast %2 : vector<8x4xf32> to vector<8x4x1xf32>
    %cst_13 = arith.constant 0.000000e+00 : f32
    %18 = vector.broadcast %cst_13 : f32 to vector<8x4x1xf32>
    %19 = arith.cmpf ogt, %17, %18 : vector<8x4x1xf32>
    %cst_14 = arith.constant -3.40282347E+38 : f32
    %20 = vector.shape_cast %19 : vector<8x4x1xi1> to vector<8x4x1xi1>
    %21 = vector.broadcast %20 : vector<8x4x1xi1> to vector<8x4x128xi1>
    %22 = vector.broadcast %cst_14 : f32 to vector<8x4x128xf32>
    %23 = arith.select %21, %16, %22 : vector<8x4x128xi1>, vector<8x4x128xf32>
    %cst_15 = arith.constant dense<0xFF800000> : vector<8x128xf32>
    %24 = vector.multi_reduction <maximumf>, %23, %cst_15 [1] : vector<8x4x128xf32> to vector<8x128xf32>
    %25 = vector.shape_cast %24 : vector<8x128xf32> to vector<8x1x128xf32>
    %26 = vector.broadcast %25 : vector<8x1x128xf32> to vector<8x4x128xf32>
    %27 = arith.subf %23, %26 : vector<8x4x128xf32>
    %28 = math.exp %27 : vector<8x4x128xf32>
    %cst_16 = arith.constant dense<0.000000e+00> : vector<8x128xf32>
    %29 = vector.multi_reduction <add>, %28, %cst_16 [1] : vector<8x4x128xf32> to vector<8x128xf32>
    %30 = vector.shape_cast %29 : vector<8x128xf32> to vector<8x1x128xf32>
    %31 = tpu.reciprocal %30 {approx = true} : vector<8x1x128xf32> -> vector<8x1x128xf32>
    %32 = vector.broadcast %31 : vector<8x1x128xf32> to vector<8x4x128xf32>
    %33 = arith.mulf %28, %32 : vector<8x4x128xf32>
    %34 = vector.broadcast %17 : vector<8x4x1xf32> to vector<8x4x128xf32>
    %35 = arith.mulf %34, %33 : vector<8x4x128xf32>
    %36 = vector.shape_cast %35 : vector<8x4x128xf32> to vector<32x128xf32>
    %c0_17 = arith.constant 0 : index
    %c0_18 = arith.constant 0 : index
    %37 = vector.load %arg17[%c0_17, %c0_18] : memref<128x32xf32, #tpu.memory_space<vmem>>, vector<128x32xf32>
    %cst_19 = arith.constant dense<0.000000e+00> : vector<32x32xf32>
    %38 = tpu.matmul %36, %37, %cst_19 {dimension_numbers = #tpu.dot_dimension_numbers<[1], [0], [0], [1], [0, 0, 1, 1], [], []>} : vector<32x128xf32>, vector<128x32xf32>, vector<32x32xf32> -> vector<32x32xf32>
    %39 = arith.mulf %38, %8 : vector<32x32xf32>
    %40 = vector.shape_cast %39 : vector<32x32xf32> to vector<8x4x32xf32>
    %cst_20 = arith.constant dense<0.000000e+00> : vector<8x32xf32>
    %41 = vector.multi_reduction <add>, %40, %cst_20 [1] : vector<8x4x32xf32> to vector<8x32xf32>
    %c0_21 = arith.constant 0 : index
    %c0_22 = arith.constant 0 : index
    %42 = vector.load %arg7[%c0_21, %c0_22] : memref<32x32xf32, #tpu.memory_space<vmem>>, vector<32x32xf32>
    %cst_23 = arith.constant dense<0.000000e+00> : vector<8x32xf32>
    %43 = tpu.matmul %41, %42, %cst_23 {dimension_numbers = #tpu.dot_dimension_numbers<[1], [0], [0], [1], [0, 0, 1, 1], [], []>} : vector<8x32xf32>, vector<32x32xf32>, vector<8x32xf32> -> vector<8x32xf32>
    %44 = arith.addf %0, %43 : vector<8x32xf32>
    %c0_24 = arith.constant 0 : index
    %c0_25 = arith.constant 0 : index
    %45 = vector.load %arg12[%c0_24, %c0_25] : memref<1x32xf32, #tpu.memory_space<vmem>>, vector<1x32xf32>
    %c0_26 = arith.constant 0 : index
    %c0_27 = arith.constant 0 : index
    %46 = vector.load %arg13[%c0_26, %c0_27] : memref<1x32xf32, #tpu.memory_space<vmem>>, vector<1x32xf32>
    %cst_28 = arith.constant dense<0.000000e+00> : vector<8xf32>
    %47 = vector.multi_reduction <add>, %44, %cst_28 [1] : vector<8x32xf32> to vector<8xf32>
    %48 = vector.shape_cast %47 : vector<8xf32> to vector<8x1xf32>
    %cst_29 = arith.constant 3.200000e+01 : f32
    %49 = vector.broadcast %cst_29 : f32 to vector<8x1xf32>
    %50 = arith.divf %48, %49 : vector<8x1xf32>
    %51 = vector.broadcast %50 : vector<8x1xf32> to vector<8x32xf32>
    %52 = arith.subf %44, %51 : vector<8x32xf32>
    %53 = arith.mulf %52, %52 : vector<8x32xf32>
    %cst_30 = arith.constant dense<0.000000e+00> : vector<8xf32>
    %54 = vector.multi_reduction <add>, %53, %cst_30 [1] : vector<8x32xf32> to vector<8xf32>
    %55 = vector.shape_cast %54 : vector<8xf32> to vector<8x1xf32>
    %cst_31 = arith.constant 0.0322580636 : f32
    %56 = vector.broadcast %cst_31 : f32 to vector<8x1xf32>
    %57 = arith.mulf %55, %56 : vector<8x1xf32>
    %cst_32 = arith.constant 9.99999997E-7 : f32
    %58 = vector.broadcast %cst_32 : f32 to vector<8x1xf32>
    %59 = arith.addf %57, %58 : vector<8x1xf32>
    %60 = math.sqrt %59 : vector<8x1xf32>
    %61 = vector.broadcast %50 : vector<8x1xf32> to vector<8x32xf32>
    %62 = arith.subf %44, %61 : vector<8x32xf32>
    %63 = vector.broadcast %45 : vector<1x32xf32> to vector<8x32xf32>
    %64 = arith.mulf %63, %62 : vector<8x32xf32>
    %cst_33 = arith.constant 9.99999997E-7 : f32
    %65 = vector.broadcast %cst_33 : f32 to vector<8x1xf32>
    %66 = arith.addf %60, %65 : vector<8x1xf32>
    %67 = vector.broadcast %66 : vector<8x1xf32> to vector<8x32xf32>
    %68 = arith.divf %64, %67 : vector<8x32xf32>
    %69 = vector.broadcast %46 : vector<1x32xf32> to vector<8x32xf32>
    %70 = arith.addf %68, %69 : vector<8x32xf32>
    %c0_34 = arith.constant 0 : index
    %c0_35 = arith.constant 0 : index
    %71 = vector.load %arg8[%c0_34, %c0_35] : memref<32x128xf32, #tpu.memory_space<vmem>>, vector<32x128xf32>
    %cst_36 = arith.constant dense<0.000000e+00> : vector<8x128xf32>
    %72 = tpu.matmul %70, %71, %cst_36 {dimension_numbers = #tpu.dot_dimension_numbers<[1], [0], [0], [1], [0, 0, 1, 1], [], []>} : vector<8x32xf32>, vector<32x128xf32>, vector<8x128xf32> -> vector<8x128xf32>
    %c0_37 = arith.constant 0 : index
    %c0_38 = arith.constant 0 : index
    %73 = vector.load %arg9[%c0_37, %c0_38] : memref<1x128xf32, #tpu.memory_space<vmem>>, vector<1x128xf32>
    %74 = vector.broadcast %73 : vector<1x128xf32> to vector<8x128xf32>
    %75 = arith.addf %72, %74 : vector<8x128xf32>
    %cst_39 = arith.constant 0.000000e+00 : f32
    %76 = vector.broadcast %cst_39 : f32 to vector<8x128xf32>
    %77 = arith.maximumf %75, %76 : vector<8x128xf32>
    %c0_40 = arith.constant 0 : index
    %c0_41 = arith.constant 0 : index
    %78 = vector.load %arg10[%c0_40, %c0_41] : memref<128x32xf32, #tpu.memory_space<vmem>>, vector<128x32xf32>
    %cst_42 = arith.constant dense<0.000000e+00> : vector<8x32xf32>
    %79 = tpu.matmul %77, %78, %cst_42 {dimension_numbers = #tpu.dot_dimension_numbers<[1], [0], [0], [1], [0, 0, 1, 1], [], []>} : vector<8x128xf32>, vector<128x32xf32>, vector<8x32xf32> -> vector<8x32xf32>
    %c0_43 = arith.constant 0 : index
    %c0_44 = arith.constant 0 : index
    %80 = vector.load %arg11[%c0_43, %c0_44] : memref<1x32xf32, #tpu.memory_space<vmem>>, vector<1x32xf32>
    %81 = vector.broadcast %80 : vector<1x32xf32> to vector<8x32xf32>
    %82 = arith.addf %79, %81 : vector<8x32xf32>
    %83 = arith.addf %70, %82 : vector<8x32xf32>
    %c0_45 = arith.constant 0 : index
    %c0_46 = arith.constant 0 : index
    %84 = vector.load %arg14[%c0_45, %c0_46] : memref<1x32xf32, #tpu.memory_space<vmem>>, vector<1x32xf32>
    %c0_47 = arith.constant 0 : index
    %c0_48 = arith.constant 0 : index
    %85 = vector.load %arg15[%c0_47, %c0_48] : memref<1x32xf32, #tpu.memory_space<vmem>>, vector<1x32xf32>
    %cst_49 = arith.constant dense<0.000000e+00> : vector<8xf32>
    %86 = vector.multi_reduction <add>, %83, %cst_49 [1] : vector<8x32xf32> to vector<8xf32>
    %87 = vector.shape_cast %86 : vector<8xf32> to vector<8x1xf32>
    %cst_50 = arith.constant 3.200000e+01 : f32
    %88 = vector.broadcast %cst_50 : f32 to vector<8x1xf32>
    %89 = arith.divf %87, %88 : vector<8x1xf32>
    %90 = vector.broadcast %89 : vector<8x1xf32> to vector<8x32xf32>
    %91 = arith.subf %83, %90 : vector<8x32xf32>
    %92 = arith.mulf %91, %91 : vector<8x32xf32>
    %cst_51 = arith.constant dense<0.000000e+00> : vector<8xf32>
    %93 = vector.multi_reduction <add>, %92, %cst_51 [1] : vector<8x32xf32> to vector<8xf32>
    %94 = vector.shape_cast %93 : vector<8xf32> to vector<8x1xf32>
    %cst_52 = arith.constant 0.0322580636 : f32
    %95 = vector.broadcast %cst_52 : f32 to vector<8x1xf32>
    %96 = arith.mulf %94, %95 : vector<8x1xf32>
    %cst_53 = arith.constant 9.99999997E-7 : f32
    %97 = vector.broadcast %cst_53 : f32 to vector<8x1xf32>
    %98 = arith.addf %96, %97 : vector<8x1xf32>
    %99 = math.sqrt %98 : vector<8x1xf32>
    %100 = vector.broadcast %89 : vector<8x1xf32> to vector<8x32xf32>
    %101 = arith.subf %83, %100 : vector<8x32xf32>
    %102 = vector.broadcast %84 : vector<1x32xf32> to vector<8x32xf32>
    %103 = arith.mulf %102, %101 : vector<8x32xf32>
    %cst_54 = arith.constant 9.99999997E-7 : f32
    %104 = vector.broadcast %cst_54 : f32 to vector<8x1xf32>
    %105 = arith.addf %99, %104 : vector<8x1xf32>
    %106 = vector.broadcast %105 : vector<8x1xf32> to vector<8x32xf32>
    %107 = arith.divf %103, %106 : vector<8x32xf32>
    %108 = vector.broadcast %85 : vector<1x32xf32> to vector<8x32xf32>
    %109 = arith.addf %107, %108 : vector<8x32xf32>
    %c0_55 = arith.constant 0 : index
    %c0_56 = arith.constant 0 : index
    %110 = vector.load %arg4[%c0_55, %c0_56] : memref<8x1xf32, #tpu.memory_space<vmem>>, vector<8x1xf32>
    %111 = vector.broadcast %110 : vector<8x1xf32> to vector<8x32xf32>
    %112 = arith.mulf %109, %111 : vector<8x32xf32>
    %c0_57 = arith.constant 0 : index
    %c0_58 = arith.constant 0 : index
    %113 = vector.load %arg18[%c0_57, %c0_58] : memref<8x32xf32, #tpu.memory_space<vmem>>, vector<8x32xf32>
    tpu.vector_store %arg18[%c0_57, %c0_58], %112 {strides = array<i32>} : memref<8x32xf32, #tpu.memory_space<vmem>>, vector<8x32xf32>,
    return
  }
  func.func @transform_0(%arg0: i32) -> (i32, i32) {
    %c0_i32 = arith.constant 0 : i32
    %c0_i32_0 = arith.constant 0 : i32
    return %arg0, %c0_i32 : i32, i32
  }
  func.func @transform_1(%arg0: i32) -> (i32, i32) {
    %c0_i32 = arith.constant 0 : i32
    %c0_i32_0 = arith.constant 0 : i32
    return %arg0, %c0_i32 : i32, i32
  }
  func.func @transform_2(%arg0: i32) -> (i32, i32) {
    %c0_i32 = arith.constant 0 : i32
    %c0_i32_0 = arith.constant 0 : i32
    return %arg0, %c0_i32 : i32, i32
  }
  func.func @transform_3(%arg0: i32) -> (i32, i32) {
    %c0_i32 = arith.constant 0 : i32
    %c0_i32_0 = arith.constant 0 : i32
    return %arg0, %c0_i32 : i32, i32
  }
  func.func @transform_4(%arg0: i32) -> (i32, i32) {
    %c0_i32 = arith.constant 0 : i32
    %c0_i32_0 = arith.constant 0 : i32
    %c0_i32_1 = arith.constant 0 : i32
    return %c0_i32, %c0_i32_0 : i32, i32
  }
  func.func @transform_5(%arg0: i32) -> (i32, i32) {
    %c0_i32 = arith.constant 0 : i32
    %c0_i32_0 = arith.constant 0 : i32
    %c0_i32_1 = arith.constant 0 : i32
    return %c0_i32, %c0_i32_0 : i32, i32
  }
  func.func @transform_6(%arg0: i32) -> (i32, i32) {
    %c0_i32 = arith.constant 0 : i32
    %c0_i32_0 = arith.constant 0 : i32
    %c0_i32_1 = arith.constant 0 : i32
    return %c0_i32, %c0_i32_0 : i32, i32
  }
  func.func @transform_7(%arg0: i32) -> (i32, i32) {
    %c0_i32 = arith.constant 0 : i32
    %c0_i32_0 = arith.constant 0 : i32
    %c0_i32_1 = arith.constant 0 : i32
    return %c0_i32, %c0_i32_0 : i32, i32
  }
  func.func @transform_8(%arg0: i32) -> (i32, i32) {
    %c0_i32 = arith.constant 0 : i32
    %c0_i32_0 = arith.constant 0 : i32
    %c0_i32_1 = arith.constant 0 : i32
    return %c0_i32, %c0_i32_0 : i32, i32
  }
  func.func @transform_9(%arg0: i32) -> (i32, i32) {
    %c0_i32 = arith.constant 0 : i32
    %c0_i32_0 = arith.constant 0 : i32
    %c0_i32_1 = arith.constant 0 : i32
    return %c0_i32, %c0_i32_0 : i32, i32
  }
  func.func @transform_10(%arg0: i32) -> (i32, i32) {
    %c0_i32 = arith.constant 0 : i32
    %c0_i32_0 = arith.constant 0 : i32
    %c0_i32_1 = arith.constant 0 : i32
    return %c0_i32, %c0_i32_0 : i32, i32
  }
  func.func @transform_11(%arg0: i32) -> (i32, i32) {
    %c0_i32 = arith.constant 0 : i32
    %c0_i32_0 = arith.constant 0 : i32
    %c0_i32_1 = arith.constant 0 : i32
    return %c0_i32, %c0_i32_0 : i32, i32
  }
  func.func @transform_12(%arg0: i32) -> (i32, i32) {
    %c0_i32 = arith.constant 0 : i32
    %c0_i32_0 = arith.constant 0 : i32
    %c0_i32_1 = arith.constant 0 : i32
    return %c0_i32, %c0_i32_0 : i32, i32
  }
  func.func @transform_13(%arg0: i32) -> (i32, i32) {
    %c0_i32 = arith.constant 0 : i32
    %c0_i32_0 = arith.constant 0 : i32
    %c0_i32_1 = arith.constant 0 : i32
    return %c0_i32, %c0_i32_0 : i32, i32
  }
  func.func @transform_14(%arg0: i32) -> (i32, i32) {
    %c0_i32 = arith.constant 0 : i32
    %c0_i32_0 = arith.constant 0 : i32
    %c0_i32_1 = arith.constant 0 : i32
    return %c0_i32, %c0_i32_0 : i32, i32
  }
  func.func @transform_15(%arg0: i32) -> (i32, i32) {
    %c0_i32 = arith.constant 0 : i32
    %c0_i32_0 = arith.constant 0 : i32
    %c0_i32_1 = arith.constant 0 : i32
    return %c0_i32, %c0_i32_0 : i32, i32
  }
  func.func @transform_16(%arg0: i32) -> (i32, i32) {
    %c0_i32 = arith.constant 0 : i32
    %c0_i32_0 = arith.constant 0 : i32
    %c0_i32_1 = arith.constant 0 : i32
    return %c0_i32, %c0_i32_0 : i32, i32
  }
  func.func @transform_17(%arg0: i32) -> (i32, i32) {
    %c0_i32 = arith.constant 0 : i32
    %c0_i32_0 = arith.constant 0 : i32
    return %arg0, %c0_i32 : i32, i32
  }
}

</mosaic_0001>

<llo_original>
// kernel: tpu_custom_call.1
$region0: #{tpu_custom_call.1}
  #allocation0 [shape = 'u32[]', space=smem, size = 0x4, offset = 0x4, fixed_abs, tag = 'smem constant byte address 0x4 - core index']
  #allocation1 [shape = 'u32[144,128]{1,0:T(1,128)}', space=vmem, size = 0x12000, scoped, tag = 'internal scratch']
  %s0 = inlined_call_operand.vmem [shape: f32[16,32], index: 0, kind: input, shape index: {}]
  %s1 = inlined_call_operand.vmem [shape: f32[64,64], index: 1, kind: input, shape index: {}]
  %s2 = inlined_call_operand.vmem [shape: f32[16,4], index: 2, kind: input, shape index: {}]
  %s3 = inlined_call_operand.vmem [shape: f32[16,1], index: 3, kind: input, shape index: {}]
  %s4 = inlined_call_operand.vmem [shape: f32[32,32], index: 4, kind: input, shape index: {}]
  %s5 = inlined_call_operand.vmem [shape: f32[64,64], index: 5, kind: input, shape index: {}]
  %s6 = inlined_call_operand.vmem [shape: f32[32,32], index: 6, kind: input, shape index: {}]
  %s7 = inlined_call_operand.vmem [shape: f32[32,128], index: 7, kind: input, shape index: {}]
  %s8 = inlined_call_operand.vmem [shape: f32[1,128], index: 8, kind: input, shape index: {}]
  %s9 = inlined_call_operand.vmem [shape: f32[128,32], index: 9, kind: input, shape index: {}]
  %s10 = inlined_call_operand.vmem [shape: f32[1,32], index: 10, kind: input, shape index: {}]
  %s11 = inlined_call_operand.vmem [shape: f32[1,32], index: 11, kind: input, shape index: {}]
  %s12 = inlined_call_operand.vmem [shape: f32[1,32], index: 12, kind: input, shape index: {}]
  %s13 = inlined_call_operand.vmem [shape: f32[1,32], index: 13, kind: input, shape index: {}]
  %s14 = inlined_call_operand.vmem [shape: f32[1,32], index: 14, kind: input, shape index: {}]
  %s15 = inlined_call_operand.vmem [shape: f32[32,128], index: 15, kind: input, shape index: {}]
  %s16 = inlined_call_operand.vmem [shape: f32[128,32], index: 16, kind: input, shape index: {}]
  %s17 = inlined_call_operand.hbm [shape: f32[16,32], index: 17, kind: output, shape index: {}]
  %s18 = sld [smem:[#allocation0]]
  $region101: #{tpu_custom_call.1} parent=0
    _
  %s20 = ssub.s32 1, %s18
  %s21 = scalar_select 0, %s20, %s18
  $region1: #{tpu_custom_call.1} parent=0
    #allocation2 [shape = 'u8[8192]{0}', space=vmem, size = 0x2000, scoped, tag = 'output window, operand 0']
    #allocation3 [shape = 's32[2]{0}', space=sflag, size = 0x8, scoped, tag = 'scoped memory for tpu_custom_call.1']
    %22 = vsyncpa [#allocation3], 0
    %s23 = scalar_lea.sflag [#allocation3], 1
    %24 = vsyncpa %s23, 0
    loop: start=0, step=1, limit=4
    $region2: #{tpu_custom_call.1} parent=1 // loop_pre_header
      _
    $region3: #{tpu_custom_call.1} parent=1 // loop_header
      %s26 = sphi 0, %s30
      %p27 = scmp.ge.s32.totalorder %s26, 4
      %s36 = sphi 0, %s38
      %s39 = sphi 0, %s36
      %s40 = sphi 0, %s39
      %s56 = sphi 0, %s40
      %s62 = sphi 0, %s64
      %s65 = sphi 0, %s62
      %s66 = sphi 0, %s65
      %s82 = sphi 0, %s66
      %s88 = sphi 0, %s90
      %s91 = sphi 0, %s88
      %s92 = sphi 0, %s91
      %s108 = sphi 0, %s92
      %s114 = sphi 0, %s116
      %s117 = sphi 0, %s114
      %s118 = sphi 0, %s117
      %s134 = sphi 0, %s118
      %s138 = sphi 0, %s138
      %s140 = sphi 0, %s138
      %s141 = sphi 0, %s140
      %s155 = sphi 0, %s141
      %s159 = sphi 0, %s159
      %s161 = sphi 0, %s159
      %s162 = sphi 0, %s161
      %s176 = sphi 0, %s162
      %s180 = sphi 0, %s180
      %s182 = sphi 0, %s180
      %s183 = sphi 0, %s182
      %s197 = sphi 0, %s183
      %s201 = sphi 0, %s201
      %s203 = sphi 0, %s201
      %s204 = sphi 0, %s203
      %s218 = sphi 0, %s204
      %s222 = sphi 0, %s222
      %s224 = sphi 0, %s222
      %s225 = sphi 0, %s224
      %s239 = sphi 0, %s225
      %s243 = sphi 0, %s243
      %s245 = sphi 0, %s243
      %s246 = sphi 0, %s245
      %s260 = sphi 0, %s246
      %s264 = sphi 0, %s264
      %s266 = sphi 0, %s264
      %s267 = sphi 0, %s266
      %s281 = sphi 0, %s267
      %s285 = sphi 0, %s285
      %s287 = sphi 0, %s285
      %s288 = sphi 0, %s287
      %s302 = sphi 0, %s288
      %s306 = sphi 0, %s306
      %s308 = sphi 0, %s306
      %s309 = sphi 0, %s308
      %s323 = sphi 0, %s309
      %s327 = sphi 0, %s327
      %s329 = sphi 0, %s327
      %s330 = sphi 0, %s329
      %s344 = sphi 0, %s330
      %s348 = sphi 0, %s348
      %s350 = sphi 0, %s348
      %s351 = sphi 0, %s350
      %s365 = sphi 0, %s351
      %s369 = sphi 0, %s369
      %s371 = sphi 0, %s369
      %s372 = sphi 0, %s371
      %s386 = sphi 0, %s372
      %s390 = sphi 0, %s390
      %s392 = sphi 0, %s390
      %s393 = sphi 0, %s392
      %s407 = sphi 0, %s393
      %s413 = sphi 0, %s415
      %s416 = sphi 0, %s413
      %s417 = sphi 0, %s416
      %s433 = sphi 0, %s417
    $region4: #{tpu_custom_call.1} parent=1 // loop_header_branch
      %29 = sbr.rel (%p27) target = $region8
    $region5: #{tpu_custom_call.1} parent=1 // loop_body
      %s31 = ssub.s32 %s26, 1
      %s32 = ssub.s32 %s26, 2
      %s33 = sadd.s32 %s26, 1
      %s34 = ssub.s32 %s26, %s33
      %p35 = scmp.eq.s32.totalorder %s34, 0
      %s37 = sadd.s32 %s36, 1
      %s38 = scalar_select %p35, %s36, %s37
      %p41 = pneg %p35
      %p42 = scmp.eq.s32.totalorder %s26, 1
      %p43 = por %p41, %p42
      %p44 = scmp.ne.s32.totalorder %s36, %s39
      %p45 = scmp.eq.s32.totalorder %s26, 0
      %p46 = por %p44, %p45
      %p47 = scmp.ne.s32.totalorder %s36, %s39
      %p48 = scmp.eq.s32.totalorder %s31, 1
      %p49 = por %p47, %p48
      %p50 = scmp.ne.s32.totalorder %s39, %s40
      %p51 = scmp.eq.s32.totalorder %s31, 0
      %p52 = por %p50, %p51
      %p53 = scmp.ne.s32.totalorder %s39, %s40
      %p54 = scmp.eq.s32.totalorder %s32, 1
      %p55 = por %p53, %p54
      %p57 = scmp.ne.s32.totalorder %s40, %s56
      %p58 = scmp.eq.s32.totalorder %s32, 0
      %p59 = por %p57, %p58
      %s60 = ssub.s32 %s26, %s33
      %p61 = scmp.eq.s32.totalorder %s60, 0
      %s63 = sadd.s32 %s62, 1
      %s64 = scalar_select %p61, %s62, %s63
      %p67 = pneg %p61
      %p68 = scmp.eq.s32.totalorder %s26, 1
      %p69 = por %p67, %p68
      %p70 = scmp.ne.s32.totalorder %s62, %s65
      %p71 = scmp.eq.s32.totalorder %s26, 0
      %p72 = por %p70, %p71
      %p73 = scmp.ne.s32.totalorder %s62, %s65
      %p74 = scmp.eq.s32.totalorder %s31, 1
      %p75 = por %p73, %p74
      %p76 = scmp.ne.s32.totalorder %s65, %s66
      %p77 = scmp.eq.s32.totalorder %s31, 0
      %p78 = por %p76, %p77
      %p79 = scmp.ne.s32.totalorder %s65, %s66
      %p80 = scmp.eq.s32.totalorder %s32, 1
      %p81 = por %p79, %p80
      %p83 = scmp.ne.s32.totalorder %s66, %s82
      %p84 = scmp.eq.s32.totalorder %s32, 0
      %p85 = por %p83, %p84
      %s86 = ssub.s32 %s26, %s33
      %p87 = scmp.eq.s32.totalorder %s86, 0
      %s89 = sadd.s32 %s88, 1
      %s90 = scalar_select %p87, %s88, %s89
      %p93 = pneg %p87
      %p94 = scmp.eq.s32.totalorder %s26, 1
      %p95 = por %p93, %p94
      %p96 = scmp.ne.s32.totalorder %s88, %s91
      %p97 = scmp.eq.s32.totalorder %s26, 0
      %p98 = por %p96, %p97
      %p99 = scmp.ne.s32.totalorder %s88, %s91
      %p100 = scmp.eq.s32.totalorder %s31, 1
      %p101 = por %p99, %p100
      %p102 = scmp.ne.s32.totalorder %s91, %s92
      %p103 = scmp.eq.s32.totalorder %s31, 0
      %p104 = por %p102, %p103
      %p105 = scmp.ne.s32.totalorder %s91, %s92
      %p106 = scmp.eq.s32.totalorder %s32, 1
      %p107 = por %p105, %p106
      %p109 = scmp.ne.s32.totalorder %s92, %s108
      %p110 = scmp.eq.s32.totalorder %s32, 0
      %p111 = por %p109, %p110
      %s112 = ssub.s32 %s26, %s33
      %p113 = scmp.eq.s32.totalorder %s112, 0
      %s115 = sadd.s32 %s114, 1
      %s116 = scalar_select %p113, %s114, %s115
      %p119 = pneg %p113
      %p120 = scmp.eq.s32.totalorder %s26, 1
      %p121 = por %p119, %p120
      %p122 = scmp.ne.s32.totalorder %s114, %s117
      %p123 = scmp.eq.s32.totalorder %s26, 0
      %p124 = por %p122, %p123
      %p125 = scmp.ne.s32.totalorder %s114, %s117
      %p126 = scmp.eq.s32.totalorder %s31, 1
      %p127 = por %p125, %p126
      %p128 = scmp.ne.s32.totalorder %s117, %s118
      %p129 = scmp.eq.s32.totalorder %s31, 0
      %p130 = por %p128, %p129
      %p131 = scmp.ne.s32.totalorder %s117, %s118
      %p132 = scmp.eq.s32.totalorder %s32, 1
      %p133 = por %p131, %p132
      %p135 = scmp.ne.s32.totalorder %s118, %s134
      %p136 = scmp.eq.s32.totalorder %s32, 0
      %p137 = por %p135, %p136
      %s139 = sadd.s32 %s138, 1
      %p142 = scmp.eq.s32.totalorder %s26, 1
      %p143 = scmp.ne.s32.totalorder %s138, %s140
      %p144 = scmp.eq.s32.totalorder %s26, 0
      %p145 = por %p143, %p144
      %p146 = scmp.ne.s32.totalorder %s138, %s140
      %p147 = scmp.eq.s32.totalorder %s31, 1
      %p148 = por %p146, %p147
      %p149 = scmp.ne.s32.totalorder %s140, %s141
      %p150 = scmp.eq.s32.totalorder %s31, 0
      %p151 = por %p149, %p150
      %p152 = scmp.ne.s32.totalorder %s140, %s141
      %p153 = scmp.eq.s32.totalorder %s32, 1
      %p154 = por %p152, %p153
      %p156 = scmp.ne.s32.totalorder %s141, %s155
      %p157 = scmp.eq.s32.totalorder %s32, 0
      %p158 = por %p156, %p157
      %s160 = sadd.s32 %s159, 1
      %p163 = scmp.eq.s32.totalorder %s26, 1
      %p164 = scmp.ne.s32.totalorder %s159, %s161
      %p165 = scmp.eq.s32.totalorder %s26, 0
      %p166 = por %p164, %p165
      %p167 = scmp.ne.s32.totalorder %s159, %s161
      %p168 = scmp.eq.s32.totalorder %s31, 1
      %p169 = por %p167, %p168
      %p170 = scmp.ne.s32.totalorder %s161, %s162
      %p171 = scmp.eq.s32.totalorder %s31, 0
      %p172 = por %p170, %p171
      %p173 = scmp.ne.s32.totalorder %s161, %s162
      %p174 = scmp.eq.s32.totalorder %s32, 1
      %p175 = por %p173, %p174
      %p177 = scmp.ne.s32.totalorder %s162, %s176
      %p178 = scmp.eq.s32.totalorder %s32, 0
      %p179 = por %p177, %p178
      %s181 = sadd.s32 %s180, 1
      %p184 = scmp.eq.s32.totalorder %s26, 1
      %p185 = scmp.ne.s32.totalorder %s180, %s182
      %p186 = scmp.eq.s32.totalorder %s26, 0
      %p187 = por %p185, %p186
      %p188 = scmp.ne.s32.totalorder %s180, %s182
      %p189 = scmp.eq.s32.totalorder %s31, 1
      %p190 = por %p188, %p189
      %p191 = scmp.ne.s32.totalorder %s182, %s183
      %p192 = scmp.eq.s32.totalorder %s31, 0
      %p193 = por %p191, %p192
      %p194 = scmp.ne.s32.totalorder %s182, %s183
      %p195 = scmp.eq.s32.totalorder %s32, 1
      %p196 = por %p194, %p195
      %p198 = scmp.ne.s32.totalorder %s183, %s197
      %p199 = scmp.eq.s32.totalorder %s32, 0
      %p200 = por %p198, %p199
      %s202 = sadd.s32 %s201, 1
      %p205 = scmp.eq.s32.totalorder %s26, 1
      %p206 = scmp.ne.s32.totalorder %s201, %s203
      %p207 = scmp.eq.s32.totalorder %s26, 0
      %p208 = por %p206, %p207
      %p209 = scmp.ne.s32.totalorder %s201, %s203
      %p210 = scmp.eq.s32.totalorder %s31, 1
      %p211 = por %p209, %p210
      %p212 = scmp.ne.s32.totalorder %s203, %s204
      %p213 = scmp.eq.s32.totalorder %s31, 0
      %p214 = por %p212, %p213
      %p215 = scmp.ne.s32.totalorder %s203, %s204
      %p216 = scmp.eq.s32.totalorder %s32, 1
      %p217 = por %p215, %p216
      %p219 = scmp.ne.s32.totalorder %s204, %s218
      %p220 = scmp.eq.s32.totalorder %s32, 0
      %p221 = por %p219, %p220
      %s223 = sadd.s32 %s222, 1
      %p226 = scmp.eq.s32.totalorder %s26, 1
      %p227 = scmp.ne.s32.totalorder %s222, %s224
      %p228 = scmp.eq.s32.totalorder %s26, 0
      %p229 = por %p227, %p228
      %p230 = scmp.ne.s32.totalorder %s222, %s224
      %p231 = scmp.eq.s32.totalorder %s31, 1
      %p232 = por %p230, %p231
      %p233 = scmp.ne.s32.totalorder %s224, %s225
      %p234 = scmp.eq.s32.totalorder %s31, 0
      %p235 = por %p233, %p234
      %p236 = scmp.ne.s32.totalorder %s224, %s225
      %p237 = scmp.eq.s32.totalorder %s32, 1
      %p238 = por %p236, %p237
      %p240 = scmp.ne.s32.totalorder %s225, %s239
      %p241 = scmp.eq.s32.totalorder %s32, 0
      %p242 = por %p240, %p241
      %s244 = sadd.s32 %s243, 1
      %p247 = scmp.eq.s32.totalorder %s26, 1
      %p248 = scmp.ne.s32.totalorder %s243, %s245
      %p249 = scmp.eq.s32.totalorder %s26, 0
      %p250 = por %p248, %p249
      %p251 = scmp.ne.s32.totalorder %s243, %s245
      %p252 = scmp.eq.s32.totalorder %s31, 1
      %p253 = por %p251, %p252
      %p254 = scmp.ne.s32.totalorder %s245, %s246
      %p255 = scmp.eq.s32.totalorder %s31, 0
      %p256 = por %p254, %p255
      %p257 = scmp.ne.s32.totalorder %s245, %s246
      %p258 = scmp.eq.s32.totalorder %s32, 1
      %p259 = por %p257, %p258
      %p261 = scmp.ne.s32.totalorder %s246, %s260
      %p262 = scmp.eq.s32.totalorder %s32, 0
      %p263 = por %p261, %p262
      %s265 = sadd.s32 %s264, 1
      %p268 = scmp.eq.s32.totalorder %s26, 1
      %p269 = scmp.ne.s32.totalorder %s264, %s266
      %p270 = scmp.eq.s32.totalorder %s26, 0
      %p271 = por %p269, %p270
      %p272 = scmp.ne.s32.totalorder %s264, %s266
      %p273 = scmp.eq.s32.totalorder %s31, 1
      %p274 = por %p272, %p273
      %p275 = scmp.ne.s32.totalorder %s266, %s267
      %p276 = scmp.eq.s32.totalorder %s31, 0
      %p277 = por %p275, %p276
      %p278 = scmp.ne.s32.totalorder %s266, %s267
      %p279 = scmp.eq.s32.totalorder %s32, 1
      %p280 = por %p278, %p279
      %p282 = scmp.ne.s32.totalorder %s267, %s281
      %p283 = scmp.eq.s32.totalorder %s32, 0
      %p284 = por %p282, %p283
      %s286 = sadd.s32 %s285, 1
      %p289 = scmp.eq.s32.totalorder %s26, 1
      %p290 = scmp.ne.s32.totalorder %s285, %s287
      %p291 = scmp.eq.s32.totalorder %s26, 0
      %p292 = por %p290, %p291
      %p293 = scmp.ne.s32.totalorder %s285, %s287
      %p294 = scmp.eq.s32.totalorder %s31, 1
      %p295 = por %p293, %p294
      %p296 = scmp.ne.s32.totalorder %s287, %s288
      %p297 = scmp.eq.s32.totalorder %s31, 0
      %p298 = por %p296, %p297
      %p299 = scmp.ne.s32.totalorder %s287, %s288
      %p300 = scmp.eq.s32.totalorder %s32, 1
      %p301 = por %p299, %p300
      %p303 = scmp.ne.s32.totalorder %s288, %s302
      %p304 = scmp.eq.s32.totalorder %s32, 0
      %p305 = por %p303, %p304
      %s307 = sadd.s32 %s306, 1
      %p310 = scmp.eq.s32.totalorder %s26, 1
      %p311 = scmp.ne.s32.totalorder %s306, %s308
      %p312 = scmp.eq.s32.totalorder %s26, 0
      %p313 = por %p311, %p312
      %p314 = scmp.ne.s32.totalorder %s306, %s308
      %p315 = scmp.eq.s32.totalorder %s31, 1
      %p316 = por %p314, %p315
      %p317 = scmp.ne.s32.totalorder %s308, %s309
      %p318 = scmp.eq.s32.totalorder %s31, 0
      %p319 = por %p317, %p318
      %p320 = scmp.ne.s32.totalorder %s308, %s309
      %p321 = scmp.eq.s32.totalorder %s32, 1
      %p322 = por %p320, %p321
      %p324 = scmp.ne.s32.totalorder %s309, %s323
      %p325 = scmp.eq.s32.totalorder %s32, 0
      %p326 = por %p324, %p325
      %s328 = sadd.s32 %s327, 1
      %p331 = scmp.eq.s32.totalorder %s26, 1
      %p332 = scmp.ne.s32.totalorder %s327, %s329
      %p333 = scmp.eq.s32.totalorder %s26, 0
      %p334 = por %p332, %p333
      %p335 = scmp.ne.s32.totalorder %s327, %s329
      %p336 = scmp.eq.s32.totalorder %s31, 1
      %p337 = por %p335, %p336
      %p338 = scmp.ne.s32.totalorder %s329, %s330
      %p339 = scmp.eq.s32.totalorder %s31, 0
      %p340 = por %p338, %p339
      %p341 = scmp.ne.s32.totalorder %s329, %s330
      %p342 = scmp.eq.s32.totalorder %s32, 1
      %p343 = por %p341, %p342
      %p345 = scmp.ne.s32.totalorder %s330, %s344
      %p346 = scmp.eq.s32.totalorder %s32, 0
      %p347 = por %p345, %p346
      %s349 = sadd.s32 %s348, 1
      %p352 = scmp.eq.s32.totalorder %s26, 1
      %p353 = scmp.ne.s32.totalorder %s348, %s350
      %p354 = scmp.eq.s32.totalorder %s26, 0
      %p355 = por %p353, %p354
      %p356 = scmp.ne.s32.totalorder %s348, %s350
      %p357 = scmp.eq.s32.totalorder %s31, 1
      %p358 = por %p356, %p357
      %p359 = scmp.ne.s32.totalorder %s350, %s351
      %p360 = scmp.eq.s32.totalorder %s31, 0
      %p361 = por %p359, %p360
      %p362 = scmp.ne.s32.totalorder %s350, %s351
      %p363 = scmp.eq.s32.totalorder %s32, 1
      %p364 = por %p362, %p363
      %p366 = scmp.ne.s32.totalorder %s351, %s365
      %p367 = scmp.eq.s32.totalorder %s32, 0
      %p368 = por %p366, %p367
      %s370 = sadd.s32 %s369, 1
      %p373 = scmp.eq.s32.totalorder %s26, 1
      %p374 = scmp.ne.s32.totalorder %s369, %s371
      %p375 = scmp.eq.s32.totalorder %s26, 0
      %p376 = por %p374, %p375
      %p377 = scmp.ne.s32.totalorder %s369, %s371
      %p378 = scmp.eq.s32.totalorder %s31, 1
      %p379 = por %p377, %p378
      %p380 = scmp.ne.s32.totalorder %s371, %s372
      %p381 = scmp.eq.s32.totalorder %s31, 0
      %p382 = por %p380, %p381
      %p383 = scmp.ne.s32.totalorder %s371, %s372
      %p384 = scmp.eq.s32.totalorder %s32, 1
      %p385 = por %p383, %p384
      %p387 = scmp.ne.s32.totalorder %s372, %s386
      %p388 = scmp.eq.s32.totalorder %s32, 0
      %p389 = por %p387, %p388
      %s391 = sadd.s32 %s390, 1
      %p394 = scmp.eq.s32.totalorder %s26, 1
      %p395 = scmp.ne.s32.totalorder %s390, %s392
      %p396 = scmp.eq.s32.totalorder %s26, 0
      %p397 = por %p395, %p396
      %p398 = scmp.ne.s32.totalorder %s390, %s392
      %p399 = scmp.eq.s32.totalorder %s31, 1
      %p400 = por %p398, %p399
      %p401 = scmp.ne.s32.totalorder %s392, %s393
      %p402 = scmp.eq.s32.totalorder %s31, 0
      %p403 = por %p401, %p402
      %p404 = scmp.ne.s32.totalorder %s392, %s393
      %p405 = scmp.eq.s32.totalorder %s32, 1
      %p406 = por %p404, %p405
      %p408 = scmp.ne.s32.totalorder %s393, %s407
      %p409 = scmp.eq.s32.totalorder %s32, 0
      %p410 = por %p408, %p409
      %s411 = ssub.s32 %s26, %s33
      %p412 = scmp.eq.s32.totalorder %s411, 0
      %s414 = sadd.s32 %s413, 1
      %s415 = scalar_select %p412, %s413, %s414
      %p418 = pneg %p412
      %p419 = scmp.eq.s32.totalorder %s26, 1
      %p420 = por %p418, %p419
      %p421 = scmp.ne.s32.totalorder %s413, %s416
      %p422 = scmp.eq.s32.totalorder %s26, 0
      %p423 = por %p421, %p422
      %p424 = scmp.ne.s32.totalorder %s413, %s416
      %p425 = scmp.eq.s32.totalorder %s31, 1
      %p426 = por %p424, %p425
      %p427 = scmp.ne.s32.totalorder %s416, %s417
      %p428 = scmp.eq.s32.totalorder %s31, 0
      %p429 = por %p427, %p428
      %p430 = scmp.ne.s32.totalorder %s416, %s417
      %p431 = scmp.eq.s32.totalorder %s32, 1
      %p432 = por %p430, %p431
      %p434 = scmp.ne.s32.totalorder %s417, %s433
      %p435 = scmp.eq.s32.totalorder %s32, 0
      %p436 = por %p434, %p435
      %p437 = scmp.le.s32.totalorder 1, %s26
      %p438 = scmp.lt.s32.totalorder %s26, 3
      %p439 = pnand %p437, %p438
      %p440 = pneg %p439
      // Predicated region
      $region9: #{tpu_custom_call.1} parent=5 // pred_check
        _
      $region10: #{tpu_custom_call.1} parent=5 // pred_check_branch
        %442 = sbr.rel (%p439) target = $region12
      $region11: #{tpu_custom_call.1} parent=5 // pred_region
        %s443 = ssub.s32 %s26, 1
        // Predicated region
        $region13: #{tpu_custom_call.1} parent=11 // pred_check
          %p444 = pneg %p151
        $region14: #{tpu_custom_call.1} parent=11 // pred_check_branch
          %446 = sbr.rel (%p444) target = $region16
        $region15: #{tpu_custom_call.1} parent=11 // pred_region
          _
        $region16: #{tpu_custom_call.1} parent=11 // pred_fallthru
          _
        // Predicated region
        $region17: #{tpu_custom_call.1} parent=11 // pred_check
          %p447 = pneg %p172
        $region18: #{tpu_custom_call.1} parent=11 // pred_check_branch
          %449 = sbr.rel (%p447) target = $region20
        $region19: #{tpu_custom_call.1} parent=11 // pred_region
          _
        $region20: #{tpu_custom_call.1} parent=11 // pred_fallthru
          _
        // Predicated region
        $region21: #{tpu_custom_call.1} parent=11 // pred_check
          %p450 = pneg %p193
        $region22: #{tpu_custom_call.1} parent=11 // pred_check_branch
          %452 = sbr.rel (%p450) target = $region24
        $region23: #{tpu_custom_call.1} parent=11 // pred_region
          _
        $region24: #{tpu_custom_call.1} parent=11 // pred_fallthru
          _
        // Predicated region
        $region25: #{tpu_custom_call.1} parent=11 // pred_check
          %p453 = pneg %p214
        $region26: #{tpu_custom_call.1} parent=11 // pred_check_branch
          %455 = sbr.rel (%p453) target = $region28
        $region27: #{tpu_custom_call.1} parent=11 // pred_region
          _
        $region28: #{tpu_custom_call.1} parent=11 // pred_fallthru
          _
        // Predicated region
        $region29: #{tpu_custom_call.1} parent=11 // pred_check
          %p456 = pneg %p235
        $region30: #{tpu_custom_call.1} parent=11 // pred_check_branch
          %458 = sbr.rel (%p456) target = $region32
        $region31: #{tpu_custom_call.1} parent=11 // pred_region
          _
        $region32: #{tpu_custom_call.1} parent=11 // pred_fallthru
          _
        // Predicated region
        $region33: #{tpu_custom_call.1} parent=11 // pred_check
          %p459 = pneg %p256
        $region34: #{tpu_custom_call.1} parent=11 // pred_check_branch
          %461 = sbr.rel (%p459) target = $region36
        $region35: #{tpu_custom_call.1} parent=11 // pred_region
          _
        $region36: #{tpu_custom_call.1} parent=11 // pred_fallthru
          _
        // Predicated region
        $region37: #{tpu_custom_call.1} parent=11 // pred_check
          %p462 = pneg %p277
        $region38: #{tpu_custom_call.1} parent=11 // pred_check_branch
          %464 = sbr.rel (%p462) target = $region40
        $region39: #{tpu_custom_call.1} parent=11 // pred_region
          _
        $region40: #{tpu_custom_call.1} parent=11 // pred_fallthru
          _
        // Predicated region
        $region41: #{tpu_custom_call.1} parent=11 // pred_check
          %p465 = pneg %p298
        $region42: #{tpu_custom_call.1} parent=11 // pred_check_branch
          %467 = sbr.rel (%p465) target = $region44
        $region43: #{tpu_custom_call.1} parent=11 // pred_region
          _
        $region44: #{tpu_custom_call.1} parent=11 // pred_fallthru
          _
        // Predicated region
        $region45: #{tpu_custom_call.1} parent=11 // pred_check
          %p468 = pneg %p319
        $region46: #{tpu_custom_call.1} parent=11 // pred_check_branch
          %470 = sbr.rel (%p468) target = $region48
        $region47: #{tpu_custom_call.1} parent=11 // pred_region
          _
        $region48: #{tpu_custom_call.1} parent=11 // pred_fallthru
          _
        // Predicated region
        $region49: #{tpu_custom_call.1} parent=11 // pred_check
          %p471 = pneg %p340
        $region50: #{tpu_custom_call.1} parent=11 // pred_check_branch
          %473 = sbr.rel (%p471) target = $region52
        $region51: #{tpu_custom_call.1} parent=11 // pred_region
          _
        $region52: #{tpu_custom_call.1} parent=11 // pred_fallthru
          _
        // Predicated region
        $region53: #{tpu_custom_call.1} parent=11 // pred_check
          %p474 = pneg %p361
        $region54: #{tpu_custom_call.1} parent=11 // pred_check_branch
          %476 = sbr.rel (%p474) target = $region56
        $region55: #{tpu_custom_call.1} parent=11 // pred_region
          _
        $region56: #{tpu_custom_call.1} parent=11 // pred_fallthru
          _
        // Predicated region
        $region57: #{tpu_custom_call.1} parent=11 // pred_check
          %p477 = pneg %p382
        $region58: #{tpu_custom_call.1} parent=11 // pred_check_branch
          %479 = sbr.rel (%p477) target = $region60
        $region59: #{tpu_custom_call.1} parent=11 // pred_region
          _
        $region60: #{tpu_custom_call.1} parent=11 // pred_fallthru
          _
        // Predicated region
        $region61: #{tpu_custom_call.1} parent=11 // pred_check
          %p480 = pneg %p403
        $region62: #{tpu_custom_call.1} parent=11 // pred_check_branch
          %482 = sbr.rel (%p480) target = $region64
        $region63: #{tpu_custom_call.1} parent=11 // pred_region
          _
        $region64: #{tpu_custom_call.1} parent=11 // pred_fallthru
          _
      $region12: #{tpu_custom_call.1} parent=5 // pred_fallthru
        _
      %p483 = scmp.lt.s32.totalorder %s26, 2
      // Predicated region
      $region65: #{tpu_custom_call.1} parent=5 // pred_check
        %p484 = pneg %p483
      $region66: #{tpu_custom_call.1} parent=5 // pred_check_branch
        %486 = sbr.rel (%p484) target = $region68
      $region67: #{tpu_custom_call.1} parent=5 // pred_region
        // Predicated region
        $region69: #{tpu_custom_call.1} parent=67 // pred_check
          %p487 = pneg %p46
        $region70: #{tpu_custom_call.1} parent=67 // pred_check_branch
          %489 = sbr.rel (%p487) target = $region72
        $region71: #{tpu_custom_call.1} parent=67 // pred_region
          %p490 = scmp.lt.s32.totalorder %s26, 1
          %s491 = scalar_select %p490, %s26, 1
          %s492 = smul.addr %s491, 8
          %s493 = scalar_lea.vmem %s0, %s492
        $region72: #{tpu_custom_call.1} parent=67 // pred_fallthru
          _
        // Predicated region
        $region73: #{tpu_custom_call.1} parent=67 // pred_check
          %p494 = pneg %p72
        $region74: #{tpu_custom_call.1} parent=67 // pred_check_branch
          %496 = sbr.rel (%p494) target = $region76
        $region75: #{tpu_custom_call.1} parent=67 // pred_region
          %s497 = smul.u32 4, %s26
          %p498 = scmp.lt.s32.totalorder %s497, 7
          %s499 = scalar_select %p498, %s497, 7
          %s500 = smul.addr %s499, 8
          %s501 = scalar_lea.vmem %s1, %s500
          %s502 = smul.u32 4, %s26
        $region76: #{tpu_custom_call.1} parent=67 // pred_fallthru
          _
        // Predicated region
        $region77: #{tpu_custom_call.1} parent=67 // pred_check
          %p503 = pneg %p98
        $region78: #{tpu_custom_call.1} parent=67 // pred_check_branch
          %505 = sbr.rel (%p503) target = $region80
        $region79: #{tpu_custom_call.1} parent=67 // pred_region
          %p506 = scmp.lt.s32.totalorder %s26, 1
          %s507 = scalar_select %p506, %s26, 1
          %s508 = smul.addr %s507, 8
          %s509 = scalar_lea.vmem %s2, %s508
        $region80: #{tpu_custom_call.1} parent=67 // pred_fallthru
          _
        // Predicated region
        $region81: #{tpu_custom_call.1} parent=67 // pred_check
          %p510 = pneg %p124
        $region82: #{tpu_custom_call.1} parent=67 // pred_check_branch
          %512 = sbr.rel (%p510) target = $region84
        $region83: #{tpu_custom_call.1} parent=67 // pred_region
          %p513 = scmp.lt.s32.totalorder %s26, 1
          %s514 = scalar_select %p513, %s26, 1
          %s515 = smul.addr %s514, 8
          %s516 = scalar_lea.vmem %s3, %s515
        $region84: #{tpu_custom_call.1} parent=67 // pred_fallthru
          _
      $region68: #{tpu_custom_call.1} parent=5 // pred_fallthru
        _
      %p517 = scmp.le.s32.totalorder 1, %s26
      %p518 = scmp.lt.s32.totalorder %s26, 3
      %p519 = pnand %p517, %p518
      %p520 = pneg %p519
      // Predicated region
      $region85: #{tpu_custom_call.1} parent=5 // pred_check
        _
      $region86: #{tpu_custom_call.1} parent=5 // pred_check_branch
        %522 = sbr.rel (%p519) target = $region88
      $region87: #{tpu_custom_call.1} parent=5 // pred_region
        %s523 = ssub.s32 %s26, 1
        %p524 = scmp.lt.s32.totalorder %s31, 1
        %s525 = scalar_select %p524, %s31, 1
        %s526 = smul.addr %s525, 8
        %s527 = scalar_lea.vmem %s0, %s526
        %p528 = pneg %p52
        %p529 = pneg %p49
        %s530 = smul.u32 4, %s31
        %p531 = scmp.lt.s32.totalorder %s530, 7
        %s532 = scalar_select %p531, %s530, 7
        %s533 = smul.addr %s532, 8
        %s534 = scalar_lea.vmem %s1, %s533
        %p535 = pneg %p78
        %p536 = pneg %p75
        %p537 = scmp.lt.s32.totalorder %s31, 1
        %s538 = scalar_select %p537, %s31, 1
        %s539 = smul.addr %s538, 8
        %s540 = scalar_lea.vmem %s2, %s539
        %p541 = pneg %p104
        %p542 = pneg %p101
        %p543 = scmp.lt.s32.totalorder %s31, 1
        %s544 = scalar_select %p543, %s31, 1
        %s545 = smul.addr %s544, 8
        %s546 = scalar_lea.vmem %s3, %s545
        %p547 = pneg %p130
        %p548 = pneg %p127
        %p549 = pneg %p151
        %p550 = pneg %p148
        %p551 = pneg %p172
        %p552 = pneg %p169
        %p553 = pneg %p193
        %p554 = pneg %p190
        %p555 = pneg %p214
        %p556 = pneg %p211
        %p557 = pneg %p235
        %p558 = pneg %p232
        %p559 = pneg %p256
        %p560 = pneg %p253
        %p561 = pneg %p277
        %p562 = pneg %p274
        %p563 = pneg %p298
        %p564 = pneg %p295
        %p565 = pneg %p319
        %p566 = pneg %p316
        %p567 = pneg %p340
        %p568 = pneg %p337
        %p569 = pneg %p361
        %p570 = pneg %p358
        %p571 = pneg %p382
        %p572 = pneg %p379
        %p573 = pneg %p403
        %p574 = pneg %p400
        %p575 = pneg %p429
        %p576 = pneg %p426
        %s577 = sand.u32 %s416, 1
        %s578 = scalar_lea.sflag [#allocation3], %s577
        %s579 = sand.u32 %s416, 1
        %s580 = smul.addr %s579, 8
        %s581 = scalar_lea.vmem [#allocation2], %s580
        %p582 = scmp.lt.s32.totalorder %s31, 1
        %s583 = scalar_select %p582, %s31, 1
        %s584 = smul.addr %s583, 8
        %s585 = scalar_lea.vmem %s0, %s584
        %s586 = smul.u32 4, %s31
        %p587 = scmp.lt.s32.totalorder %s586, 7
        %s588 = scalar_select %p587, %s586, 7
        %s589 = smul.addr %s588, 8
        %s590 = scalar_lea.vmem %s1, %s589
        %s591 = smul.u32 4, %s31
        %p592 = scmp.lt.s32.totalorder %s31, 1
        %s593 = scalar_select %p592, %s31, 1
        %s594 = smul.addr %s593, 8
        %s595 = scalar_lea.vmem %s2, %s594
        %p596 = scmp.lt.s32.totalorder %s31, 1
        %s597 = scalar_select %p596, %s31, 1
        %s598 = smul.addr %s597, 8
        %s599 = scalar_lea.vmem %s3, %s598
        %v600 = vld [vmem:[%s585] sm:$0xff]
        %v601 = vld [vmem:[%s590] sm:$0xff]
        %v602 = vld [vmem:[%s590 + $0x8] sm:$0xff]
        %v603 = vld [vmem:[%s590 + $0x10] sm:$0xff]
        %v604 = vld [vmem:[%s590 + $0x18] sm:$0xff]
        %v605 = vld [vmem:[%s595] sm:$0xff]
        %v606 = vld [vmem:[%s4] sm:$0xff]
        %v607 = vld [vmem:[%s4 + $0x8] sm:$0xff]
        %v608 = vld [vmem:[%s4 + $0x10] sm:$0xff]
        %v609 = vld [vmem:[%s4 + $0x18] sm:$0xff]
        %vm610 = vcmask 261120
        %v612 = vsel %vm610, %v600, 0
        %614 = vmatprep.subr.mxu0 0.0
        %615 = vmatpush1.msra.mxu0 %v606
        %616 = vmatprep.subr.mxu0 0.0
        %617 = vmatpush1.msra.mxu0 %v607
        %618 = vmatprep.subr.mxu0 0.0
        %619 = vmatpush1.msra.mxu0 %v608
        %620 = vmatprep.subr.mxu0 0.0
        %621 = vmatpush1.msra.mxu0 %v609
        %622 = vmatprep.subr.mxu0 0.0
        %623 = vmatpush1.msra.mxu0 0.0
        %624 = vmatprep.subr.mxu0 0.0
        %625 = vmatpush1.msra.mxu0 0.0
        %626 = vmatprep.subr.mxu0 0.0
        %627 = vmatpush1.msra.mxu0 0.0
        %628 = vmatprep.subr.mxu0 0.0
        %629 = vmatpush1.msra.mxu0 0.0
        %630 = vmatprep.subr.mxu0 0.0
        %631 = vmatpush1.msra.mxu0 0.0
        %632 = vmatprep.subr.mxu0 0.0
        %633 = vmatpush1.msra.mxu0 0.0
        %634 = vmatprep.subr.mxu0 0.0
        %635 = vmatpush1.msra.mxu0 0.0
        %636 = vmatprep.subr.mxu0 0.0
        %637 = vmatpush1.msra.mxu0 0.0
        %638 = vmatprep.subr.mxu0 0.0
        %639 = vmatpush1.msra.mxu0 0.0
        %640 = vmatprep.subr.mxu0 0.0
        %641 = vmatpush1.msra.mxu0 0.0
        %642 = vmatprep.subr.mxu0 0.0
        %643 = vmatpush1.msra.mxu0 0.0
        %644 = vmatprep.subr.mxu0 0.0
        %645 = vmatpush1.msra.mxu0 0.0
        %646 = vmatprep.subr.mxu0 0.0
        %647 = vmatpush1.msra.mxu0 0.0
        %648 = vmatprep.subr.mxu0 0.0
        %649 = vmatpush1.msra.mxu0 0.0
        %650 = vmatprep.subr.mxu0 0.0
        %651 = vmatpush1.msra.mxu0 0.0
        %652 = vmatprep.subr.mxu0 0.0
        %653 = vmatpush1.msra.mxu0 0.0
        %654 = vmatprep.subr.mxu0 0.0
        %655 = vmatpush1.msra.mxu0 0.0
        %656 = vmatprep.subr.mxu0 0.0
        %657 = vmatpush1.msra.mxu0 0.0
        %658 = vmatprep.subr.mxu0 0.0
        %659 = vmatpush1.msra.mxu0 0.0
        %660 = vmatprep.subr.mxu0 0.0
        %661 = vmatpush1.msra.mxu0 0.0
        %662 = vmatprep.subr.mxu0 0.0
        %663 = vmatpush1.msra.mxu0 0.0
        %664 = vmatprep.subr.mxu0 0.0
        %665 = vmatpush1.msra.mxu0 0.0
        %666 = vmatprep.subr.mxu0 0.0
        %667 = vmatpush1.msra.mxu0 0.0
        %668 = vmatprep.subr.mxu0 0.0
        %669 = vmatpush1.msra.mxu0 0.0
        %670 = vmatprep.subr.mxu0 0.0
        %671 = vmatpush1.msra.mxu0 0.0
        %672 = vmatprep.subr.mxu0 0.0
        %673 = vmatpush1.msra.mxu0 0.0
        %674 = vmatprep.subr.mxu0 0.0
        %675 = vmatpush1.msra.mxu0 0.0
        %676 = vmatprep.subr.mxu0 0.0
        %677 = vmatpush1.msra.mxu0 0.0
        %678 = vmatprep.mubr.f32.mxu0 0.0
        %679 = vmatmul.mubr.f32.gmra.mrb[0].mxu0 %v612
        %v680 = vpop.f32.mrb[0].mxu0
        %v681 = vadd.f32 0.0, %v680
        %v682 = vpop.f32.mrb[0].mxu0
        %683 = vdwg.mxu0
        %v684 = vld [vmem:[%s5] sm:$0xff]
        %v685 = vld [vmem:[%s5 + $0x8] sm:$0xff]
        %v686 = vld [vmem:[%s5 + $0x10] sm:$0xff]
        %v687 = vld [vmem:[%s5 + $0x18] sm:$0xff]
        %v688 = vld [vmem:[%s5 + $0x20] sm:$0xff]
        %v689 = vld [vmem:[%s5 + $0x28] sm:$0xff]
        %v690 = vld [vmem:[%s5 + $0x30] sm:$0xff]
        %v691 = vld [vmem:[%s5 + $0x38] sm:$0xff]
        %vm692 = vcmask 523264
        %v694 = vsel %vm692, %v601, 0
        %v697 = vsel %vm692, %v602, 0
        %v700 = vsel %vm692, %v603, 0
        %v703 = vsel %vm692, %v604, 0
        %705 = vmatprep.subr.mxu0 0.0
        %706 = vmatpush1.msra.mxu0 %v684
        %707 = vmatprep.subr.mxu0 0.0
        %708 = vmatpush1.msra.mxu0 %v685
        %709 = vmatprep.subr.mxu0 0.0
        %710 = vmatpush1.msra.mxu0 %v686
        %711 = vmatprep.subr.mxu0 0.0
        %712 = vmatpush1.msra.mxu0 %v687
        %713 = vmatprep.subr.mxu0 0.0
        %714 = vmatpush1.msra.mxu0 %v688
        %715 = vmatprep.subr.mxu0 0.0
        %716 = vmatpush1.msra.mxu0 %v689
        %717 = vmatprep.subr.mxu0 0.0
        %718 = vmatpush1.msra.mxu0 %v690
        %719 = vmatprep.subr.mxu0 0.0
        %720 = vmatpush1.msra.mxu0 %v691
        %721 = vmatprep.subr.mxu0 0.0
        %722 = vmatpush1.msra.mxu0 0.0
        %723 = vmatprep.subr.mxu0 0.0
        %724 = vmatpush1.msra.mxu0 0.0
        %725 = vmatprep.subr.mxu0 0.0
        %726 = vmatpush1.msra.mxu0 0.0
        %727 = vmatprep.subr.mxu0 0.0
        %728 = vmatpush1.msra.mxu0 0.0
        %729 = vmatprep.subr.mxu0 0.0
        %730 = vmatpush1.msra.mxu0 0.0
        %731 = vmatprep.subr.mxu0 0.0
        %732 = vmatpush1.msra.mxu0 0.0
        %733 = vmatprep.subr.mxu0 0.0
        %734 = vmatpush1.msra.mxu0 0.0
        %735 = vmatprep.subr.mxu0 0.0
        %736 = vmatpush1.msra.mxu0 0.0
        %737 = vmatprep.subr.mxu0 0.0
        %738 = vmatpush1.msra.mxu0 0.0
        %739 = vmatprep.subr.mxu0 0.0
        %740 = vmatpush1.msra.mxu0 0.0
        %741 = vmatprep.subr.mxu0 0.0
        %742 = vmatpush1.msra.mxu0 0.0
        %743 = vmatprep.subr.mxu0 0.0
        %744 = vmatpush1.msra.mxu0 0.0
        %745 = vmatprep.subr.mxu0 0.0
        %746 = vmatpush1.msra.mxu0 0.0
        %747 = vmatprep.subr.mxu0 0.0
        %748 = vmatpush1.msra.mxu0 0.0
        %749 = vmatprep.subr.mxu0 0.0
        %750 = vmatpush1.msra.mxu0 0.0
        %751 = vmatprep.subr.mxu0 0.0
        %752 = vmatpush1.msra.mxu0 0.0
        %753 = vmatprep.subr.mxu0 0.0
        %754 = vmatpush1.msra.mxu0 0.0
        %755 = vmatprep.subr.mxu0 0.0
        %756 = vmatpush1.msra.mxu0 0.0
        %757 = vmatprep.subr.mxu0 0.0
        %758 = vmatpush1.msra.mxu0 0.0
        %759 = vmatprep.subr.mxu0 0.0
        %760 = vmatpush1.msra.mxu0 0.0
        %761 = vmatprep.subr.mxu0 0.0
        %762 = vmatpush1.msra.mxu0 0.0
        %763 = vmatprep.subr.mxu0 0.0
        %764 = vmatpush1.msra.mxu0 0.0
        %765 = vmatprep.subr.mxu0 0.0
        %766 = vmatpush1.msra.mxu0 0.0
        %767 = vmatprep.subr.mxu0 0.0
        %768 = vmatpush1.msra.mxu0 0.0
        %769 = vmatprep.mubr.f32.mxu0 0.0
        %770 = vmatmul.mubr.f32.gmra.mrb[0].mxu0 %v694
        %v771 = vpop.f32.mrb[0].mxu0
        %v772 = vadd.f32 0.0, %v771
        %v773 = vpop.f32.mrb[0].mxu0
        %774 = vmatprep.mubr.f32.mxu0 0.0
        %775 = vmatmul.mubr.f32.gmra.mrb[0].mxu0 %v697
        %v776 = vpop.f32.mrb[0].mxu0
        %v777 = vadd.f32 0.0, %v776
        %v778 = vpop.f32.mrb[0].mxu0
        %779 = vmatprep.mubr.f32.mxu0 0.0
        %780 = vmatmul.mubr.f32.gmra.mrb[0].mxu0 %v700
        %v781 = vpop.f32.mrb[0].mxu0
        %v782 = vadd.f32 0.0, %v781
        %v783 = vpop.f32.mrb[0].mxu0
        %784 = vmatprep.mubr.f32.mxu0 0.0
        %785 = vmatmul.mubr.f32.gmra.mrb[0].mxu0 %v703
        %v786 = vpop.f32.mrb[0].mxu0
        %v787 = vadd.f32 0.0, %v786
        %v788 = vpop.f32.mrb[0].mxu0
        %789 = vdwg.mxu0
        %v794 = vcombine.high %v772, %v772
        %v795 = vcombine.high %v777, %v777
        %v796 = vcombine.high %v782, %v782
        %v797 = vcombine.high %v787, %v787
        %v803 = vcombine.high %v681, %v681
        %v805 = vunpack.c.l.s4 1966171168
        %v806 = vunpack.c.0.s8 %v805
        %v807 = vlaneseq
        %v808 = vshrl.u32 %v807, 7
        %v809 = vsub.s32 %v806, %v808
        %v810 = vrot.slane %v681, %v809
        %v812 = vunpack.c.l.s4 1966171168
        %v813 = vunpack.c.0.s8 %v812
        %v814 = vlaneseq
        %v815 = vshrl.u32 %v814, 7
        %v816 = vsub.s32 %v813, %v815
        %v817 = vrot.slane %v803, %v816
        %v818 = vcombine.high %v810, %v810
        %v819 = vcombine.high %v817, %v817
        %v821 = vunpack.c.l.s4 1966171168
        %v822 = vunpack.c.0.s8 %v821
        %v823 = vlaneseq
        %v824 = vshrl.u32 %v823, 7
        %v825 = vsub.s32 %v822, %v824
        %v826 = vrot.slane %v810, %v825
        %v828 = vunpack.c.l.s4 1966171168
        %v829 = vunpack.c.0.s8 %v828
        %v830 = vlaneseq
        %v831 = vshrl.u32 %v830, 7
        %v832 = vsub.s32 %v829, %v831
        %v833 = vrot.slane %v817, %v832
        %v835 = vunpack.c.l.s4 1966171168
        %v836 = vunpack.c.0.s8 %v835
        %v837 = vlaneseq
        %v838 = vshrl.u32 %v837, 7
        %v839 = vsub.s32 %v836, %v838
        %v840 = vrot.slane %v818, %v839
        %v842 = vunpack.c.l.s4 1966171168
        %v843 = vunpack.c.0.s8 %v842
        %v844 = vlaneseq
        %v845 = vshrl.u32 %v844, 7
        %v846 = vsub.s32 %v843, %v845
        %v847 = vrot.slane %v819, %v846
        %v848 = vcombine.high %v826, %v826
        %v849 = vcombine.high %v833, %v833
        %v850 = vcombine.high %v840, %v840
        %v851 = vcombine.high %v847, %v847
        %v852 = vlaneseq
        %v853 = vshrl.u32 %v852, 7
        %v854 = vsub.s32 0, %v853
        %v855 = vrot.slane %v826, %v854
        %v856 = vlaneseq
        %v857 = vshrl.u32 %v856, 7
        %v858 = vsub.s32 0, %v857
        %v859 = vrot.slane %v840, %v858
        %v860 = vlaneseq
        %v861 = vshrl.u32 %v860, 7
        %v862 = vsub.s32 0, %v861
        %v863 = vrot.slane %v848, %v862
        %v864 = vlaneseq
        %v865 = vshrl.u32 %v864, 7
        %v866 = vsub.s32 0, %v865
        %v867 = vrot.slane %v850, %v866
        %v868 = vlaneseq
        %v869 = vshrl.u32 %v868, 7
        %v870 = vsub.s32 0, %v869
        %v871 = vrot.slane %v833, %v870
        %v872 = vlaneseq
        %v873 = vshrl.u32 %v872, 7
        %v874 = vsub.s32 0, %v873
        %v875 = vrot.slane %v847, %v874
        %v876 = vlaneseq
        %v877 = vshrl.u32 %v876, 7
        %v878 = vsub.s32 0, %v877
        %v879 = vrot.slane %v849, %v878
        %v880 = vlaneseq
        %v881 = vshrl.u32 %v880, 7
        %v882 = vsub.s32 0, %v881
        %v883 = vrot.slane %v851, %v882
        %v892 = vmul.f32 %v855, %v772
        %v893 = vmul.f32 %v859, %v794
        %v894 = vmul.f32 %v863, %v777
        %v895 = vmul.f32 %v867, %v795
        %v896 = vmul.f32 %v871, %v782
        %v897 = vmul.f32 %v875, %v796
        %v898 = vmul.f32 %v879, %v787
        %v899 = vmul.f32 %v883, %v797
        %v900 = vld [vmem:[%s15] sm:$0xff]
        %v901 = vld [vmem:[%s15 + $0x8] sm:$0xff]
        %v902 = vld [vmem:[%s15 + $0x10] sm:$0xff]
        %v903 = vld [vmem:[%s15 + $0x18] sm:$0xff]
        %v912 = vcombine.low %v892, %v893
        %v913 = vcombine.low %v894, %v895
        %v914 = vcombine.low %v896, %v897
        %v915 = vcombine.low %v898, %v899
        %v916 = vsel %vm610, %v912, 0
        %v918 = vsel %vm610, %v913, 0
        %v920 = vsel %vm610, %v914, 0
        %v922 = vsel %vm610, %v915, 0
        %924 = vmatprep.subr.mxu0 0.0
        %925 = vmatpush1.msra.mxu0 %v900
        %926 = vmatprep.subr.mxu0 0.0
        %927 = vmatpush1.msra.mxu0 %v901
        %928 = vmatprep.subr.mxu0 0.0
        %929 = vmatpush1.msra.mxu0 %v902
        %930 = vmatprep.subr.mxu0 0.0
        %931 = vmatpush1.msra.mxu0 %v903
        %932 = vmatprep.subr.mxu0 0.0
        %933 = vmatpush1.msra.mxu0 0.0
        %934 = vmatprep.subr.mxu0 0.0
        %935 = vmatpush1.msra.mxu0 0.0
        %936 = vmatprep.subr.mxu0 0.0
        %937 = vmatpush1.msra.mxu0 0.0
        %938 = vmatprep.subr.mxu0 0.0
        %939 = vmatpush1.msra.mxu0 0.0
        %940 = vmatprep.subr.mxu0 0.0
        %941 = vmatpush1.msra.mxu0 0.0
        %942 = vmatprep.subr.mxu0 0.0
        %943 = vmatpush1.msra.mxu0 0.0
        %944 = vmatprep.subr.mxu0 0.0
        %945 = vmatpush1.msra.mxu0 0.0
        %946 = vmatprep.subr.mxu0 0.0
        %947 = vmatpush1.msra.mxu0 0.0
        %948 = vmatprep.subr.mxu0 0.0
        %949 = vmatpush1.msra.mxu0 0.0
        %950 = vmatprep.subr.mxu0 0.0
        %951 = vmatpush1.msra.mxu0 0.0
        %952 = vmatprep.subr.mxu0 0.0
        %953 = vmatpush1.msra.mxu0 0.0
        %954 = vmatprep.subr.mxu0 0.0
        %955 = vmatpush1.msra.mxu0 0.0
        %956 = vmatprep.subr.mxu0 0.0
        %957 = vmatpush1.msra.mxu0 0.0
        %958 = vmatprep.subr.mxu0 0.0
        %959 = vmatpush1.msra.mxu0 0.0
        %960 = vmatprep.subr.mxu0 0.0
        %961 = vmatpush1.msra.mxu0 0.0
        %962 = vmatprep.subr.mxu0 0.0
        %963 = vmatpush1.msra.mxu0 0.0
        %964 = vmatprep.subr.mxu0 0.0
        %965 = vmatpush1.msra.mxu0 0.0
        %966 = vmatprep.subr.mxu0 0.0
        %967 = vmatpush1.msra.mxu0 0.0
        %968 = vmatprep.subr.mxu0 0.0
        %969 = vmatpush1.msra.mxu0 0.0
        %970 = vmatprep.subr.mxu0 0.0
        %971 = vmatpush1.msra.mxu0 0.0
        %972 = vmatprep.subr.mxu0 0.0
        %973 = vmatpush1.msra.mxu0 0.0
        %974 = vmatprep.subr.mxu0 0.0
        %975 = vmatpush1.msra.mxu0 0.0
        %976 = vmatprep.subr.mxu0 0.0
        %977 = vmatpush1.msra.mxu0 0.0
        %978 = vmatprep.subr.mxu0 0.0
        %979 = vmatpush1.msra.mxu0 0.0
        %980 = vmatprep.subr.mxu0 0.0
        %981 = vmatpush1.msra.mxu0 0.0
        %982 = vmatprep.subr.mxu0 0.0
        %983 = vmatpush1.msra.mxu0 0.0
        %984 = vmatprep.subr.mxu0 0.0
        %985 = vmatpush1.msra.mxu0 0.0
        %986 = vmatprep.subr.mxu0 0.0
        %987 = vmatpush1.msra.mxu0 0.0
        %988 = vmatprep.mubr.f32.mxu0 0.0
        %989 = vmatmul.mubr.f32.gmra.mrb[0].mxu0 %v916
        %v990 = vpop.f32.mrb[0].mxu0
        %v991 = vadd.f32 0.0, %v990
        %v992 = vpop.f32.mrb[0].mxu0
        %993 = vmatprep.mubr.f32.mxu0 0.0
        %994 = vmatmul.mubr.f32.gmra.mrb[0].mxu0 %v918
        %v995 = vpop.f32.mrb[0].mxu0
        %v996 = vadd.f32 0.0, %v995
        %v997 = vpop.f32.mrb[0].mxu0
        %998 = vmatprep.mubr.f32.mxu0 0.0
        %999 = vmatmul.mubr.f32.gmra.mrb[0].mxu0 %v920
        %v1000 = vpop.f32.mrb[0].mxu0
        %v1001 = vadd.f32 0.0, %v1000
        %v1002 = vpop.f32.mrb[0].mxu0
        %1003 = vmatprep.mubr.f32.mxu0 0.0
        %1004 = vmatmul.mubr.f32.gmra.mrb[0].mxu0 %v922
        %v1005 = vpop.f32.mrb[0].mxu0
        %v1006 = vadd.f32 0.0, %v1005
        %v1007 = vpop.f32.mrb[0].mxu0
        %1008 = vdwg.mxu0
        %v1013 = vcombine.high %v991, %v991
        %v1014 = vcombine.high %v996, %v996
        %v1015 = vcombine.high %v1001, %v1001
        %v1016 = vcombine.high %v1006, %v1006
        %v1021 = vlaneseq
        %v1022 = vshrl.u32 %v1021, 7
        %v1023 = vsub.s32 0, %v1022
        %v1024 = vrot.slane %v605, %v1023
        %1026 = vbcast.lane.b32.xlu0 %v1024, 256
        %v1027 = vpop.permute.xlu0 %1026
        %v1028 = vlaneseq
        %v1029 = vshrl.u32 %v1028, 7
        %v1030 = vsub.s32 1, %v1029
        %v1031 = vrot.slane %v605, %v1030
        %1033 = vbcast.lane.b32.xlu0 %v1031, 256
        %v1034 = vpop.permute.xlu0 %1033
        %v1035 = vlaneseq
        %v1036 = vshrl.u32 %v1035, 7
        %v1037 = vsub.s32 2, %v1036
        %v1038 = vrot.slane %v605, %v1037
        %1040 = vbcast.lane.b32.xlu0 %v1038, 256
        %v1041 = vpop.permute.xlu0 %1040
        %v1042 = vlaneseq
        %v1043 = vshrl.u32 %v1042, 7
        %v1044 = vsub.s32 3, %v1043
        %v1045 = vrot.slane %v605, %v1044
        %1047 = vbcast.lane.b32.xlu0 %v1045, 256
        %v1048 = vpop.permute.xlu0 %1047
        %v1049 = vlaneseq
        %v1050 = vshrl.u32 %v1049, 7
        %v1051 = vsub.s32 4, %v1050
        %v1052 = vrot.slane %v605, %v1051
        %1054 = vbcast.lane.b32.xlu0 %v1052, 256
        %v1055 = vpop.permute.xlu0 %1054
        %v1056 = vlaneseq
        %v1057 = vshrl.u32 %v1056, 7
        %v1058 = vsub.s32 5, %v1057
        %v1059 = vrot.slane %v605, %v1058
        %1061 = vbcast.lane.b32.xlu0 %v1059, 256
        %v1062 = vpop.permute.xlu0 %1061
        %v1063 = vlaneseq
        %v1064 = vshrl.u32 %v1063, 7
        %v1065 = vsub.s32 6, %v1064
        %v1066 = vrot.slane %v605, %v1065
        %1068 = vbcast.lane.b32.xlu0 %v1066, 256
        %v1069 = vpop.permute.xlu0 %1068
        %v1070 = vlaneseq
        %v1071 = vshrl.u32 %v1070, 7
        %v1072 = vsub.s32 7, %v1071
        %v1073 = vrot.slane %v605, %v1072
        %1075 = vbcast.lane.b32.xlu0 %v1073, 256
        %v1076 = vpop.permute.xlu0 %1075
        %vm1077 = vcmp.gt.f32.partialorder %v1027, 0.0
        %vm1078 = vcmp.gt.f32.partialorder %v1034, 0.0
        %vm1079 = vcmp.gt.f32.partialorder %v1041, 0.0
        %vm1080 = vcmp.gt.f32.partialorder %v1048, 0.0
        %vm1081 = vcmp.gt.f32.partialorder %v1055, 0.0
        %vm1082 = vcmp.gt.f32.partialorder %v1062, 0.0
        %vm1083 = vcmp.gt.f32.partialorder %v1069, 0.0
        %vm1084 = vcmp.gt.f32.partialorder %v1076, 0.0
        %v1085 = vsel %vm1077, 1, 0
        %v1086 = vsel %vm1078, 1, 0
        %v1087 = vsel %vm1079, 1, 0
        %v1088 = vsel %vm1080, 1, 0
        %v1089 = vsel %vm1081, 1, 0
        %v1090 = vsel %vm1082, 1, 0
        %v1091 = vsel %vm1083, 1, 0
        %v1092 = vsel %vm1084, 1, 0
        %vm1093 = vcmp.eq.s32.totalorder %v1085, 1
        %vm1094 = vcmp.eq.s32.totalorder %v1086, 1
        %vm1095 = vcmp.eq.s32.totalorder %v1087, 1
        %vm1096 = vcmp.eq.s32.totalorder %v1088, 1
        %vm1097 = vcmp.eq.s32.totalorder %v1089, 1
        %vm1098 = vcmp.eq.s32.totalorder %v1090, 1
        %vm1099 = vcmp.eq.s32.totalorder %v1091, 1
        %vm1100 = vcmp.eq.s32.totalorder %v1092, 1
        %v1101 = vsel %vm1093, %v991, -3.4028235e+38
        %v1102 = vsel %vm1094, %v1013, -3.4028235e+38
        %v1103 = vsel %vm1095, %v996, -3.4028235e+38
        %v1104 = vsel %vm1096, %v1014, -3.4028235e+38
        %v1105 = vsel %vm1097, %v1001, -3.4028235e+38
        %v1106 = vsel %vm1098, %v1015, -3.4028235e+38
        %v1107 = vsel %vm1099, %v1006, -3.4028235e+38
        %v1108 = vsel %vm1100, %v1016, -3.4028235e+38
        %vm1109 = vcmask 1043456
        %v1110 = vsel %vm1109, %v1101, -inf
        %v1111 = vrot.slane %v1110, 4
        %v1112 = vmax.f32 %v1110, %v1111
        %v1113 = vrot.slane %v1112, 2
        %v1114 = vmax.f32 %v1112, %v1113
        %v1115 = vrot.slane %v1114, 1
        %v1116 = vmax.f32 %v1114, %v1115
        %v1117 = vsel %vm1109, %v1102, -inf
        %v1118 = vrot.slane %v1117, 4
        %v1119 = vmax.f32 %v1117, %v1118
        %v1120 = vrot.slane %v1119, 2
        %v1121 = vmax.f32 %v1119, %v1120
        %v1122 = vrot.slane %v1121, 1
        %v1123 = vmax.f32 %v1121, %v1122
        %v1124 = vsel %vm1109, %v1103, -inf
        %v1125 = vrot.slane %v1124, 4
        %v1126 = vmax.f32 %v1124, %v1125
        %v1127 = vrot.slane %v1126, 2
        %v1128 = vmax.f32 %v1126, %v1127
        %v1129 = vrot.slane %v1128, 1
        %v1130 = vmax.f32 %v1128, %v1129
        %v1131 = vsel %vm1109, %v1104, -inf
        %v1132 = vrot.slane %v1131, 4
        %v1133 = vmax.f32 %v1131, %v1132
        %v1134 = vrot.slane %v1133, 2
        %v1135 = vmax.f32 %v1133, %v1134
        %v1136 = vrot.slane %v1135, 1
        %v1137 = vmax.f32 %v1135, %v1136
        %v1138 = vsel %vm1109, %v1105, -inf
        %v1139 = vrot.slane %v1138, 4
        %v1140 = vmax.f32 %v1138, %v1139
        %v1141 = vrot.slane %v1140, 2
        %v1142 = vmax.f32 %v1140, %v1141
        %v1143 = vrot.slane %v1142, 1
        %v1144 = vmax.f32 %v1142, %v1143
        %v1145 = vsel %vm1109, %v1106, -inf
        %v1146 = vrot.slane %v1145, 4
        %v1147 = vmax.f32 %v1145, %v1146
        %v1148 = vrot.slane %v1147, 2
        %v1149 = vmax.f32 %v1147, %v1148
        %v1150 = vrot.slane %v1149, 1
        %v1151 = vmax.f32 %v1149, %v1150
        %v1152 = vsel %vm1109, %v1107, -inf
        %v1153 = vrot.slane %v1152, 4
        %v1154 = vmax.f32 %v1152, %v1153
        %v1155 = vrot.slane %v1154, 2
        %v1156 = vmax.f32 %v1154, %v1155
        %v1157 = vrot.slane %v1156, 1
        %v1158 = vmax.f32 %v1156, %v1157
        %v1159 = vsel %vm1109, %v1108, -inf
        %v1160 = vrot.slane %v1159, 4
        %v1161 = vmax.f32 %v1159, %v1160
        %v1162 = vrot.slane %v1161, 2
        %v1163 = vmax.f32 %v1161, %v1162
        %v1164 = vrot.slane %v1163, 1
        %v1165 = vmax.f32 %v1163, %v1164
        %v1166 = vsub.f32 %v1101, %v1116
        %v1167 = vsub.f32 %v1102, %v1123
        %v1168 = vsub.f32 %v1103, %v1130
        %v1169 = vsub.f32 %v1104, %v1137
        %v1170 = vsub.f32 %v1105, %v1144
        %v1171 = vsub.f32 %v1106, %v1151
        %v1172 = vsub.f32 %v1107, %v1158
        %v1173 = vsub.f32 %v1108, %v1165
        %v1174 = vmul.f32 %v1166, 1.442695
        %v1175 = vpow.pop %v1174
        %v1176 = vmul.f32 %v1167, 1.442695
        %v1177 = vpow.pop %v1176
        %v1178 = vmul.f32 %v1168, 1.442695
        %v1179 = vpow.pop %v1178
        %v1180 = vmul.f32 %v1169, 1.442695
        %v1181 = vpow.pop %v1180
        %v1182 = vmul.f32 %v1170, 1.442695
        %v1183 = vpow.pop %v1182
        %v1184 = vmul.f32 %v1171, 1.442695
        %v1185 = vpow.pop %v1184
        %v1186 = vmul.f32 %v1172, 1.442695
        %v1187 = vpow.pop %v1186
        %v1188 = vmul.f32 %v1173, 1.442695
        %v1189 = vpow.pop %v1188
        %v1190 = vsel %vm1109, %v1175, 0.0
        %v1191 = vrot.slane %v1190, 4
        %v1192 = vadd.f32 %v1190, %v1191
        %v1193 = vrot.slane %v1192, 2
        %v1194 = vadd.f32 %v1192, %v1193
        %v1195 = vrot.slane %v1194, 1
        %v1196 = vadd.f32 %v1194, %v1195
        %v1197 = vsel %vm1109, %v1177, 0.0
        %v1198 = vrot.slane %v1197, 4
        %v1199 = vadd.f32 %v1197, %v1198
        %v1200 = vrot.slane %v1199, 2
        %v1201 = vadd.f32 %v1199, %v1200
        %v1202 = vrot.slane %v1201, 1
        %v1203 = vadd.f32 %v1201, %v1202
        %v1204 = vsel %vm1109, %v1179, 0.0
        %v1205 = vrot.slane %v1204, 4
        %v1206 = vadd.f32 %v1204, %v1205
        %v1207 = vrot.slane %v1206, 2
        %v1208 = vadd.f32 %v1206, %v1207
        %v1209 = vrot.slane %v1208, 1
        %v1210 = vadd.f32 %v1208, %v1209
        %v1211 = vsel %vm1109, %v1181, 0.0
        %v1212 = vrot.slane %v1211, 4
        %v1213 = vadd.f32 %v1211, %v1212
        %v1214 = vrot.slane %v1213, 2
        %v1215 = vadd.f32 %v1213, %v1214
        %v1216 = vrot.slane %v1215, 1
        %v1217 = vadd.f32 %v1215, %v1216
        %v1218 = vsel %vm1109, %v1183, 0.0
        %v1219 = vrot.slane %v1218, 4
        %v1220 = vadd.f32 %v1218, %v1219
        %v1221 = vrot.slane %v1220, 2
        %v1222 = vadd.f32 %v1220, %v1221
        %v1223 = vrot.slane %v1222, 1
        %v1224 = vadd.f32 %v1222, %v1223
        %v1225 = vsel %vm1109, %v1185, 0.0
        %v1226 = vrot.slane %v1225, 4
        %v1227 = vadd.f32 %v1225, %v1226
        %v1228 = vrot.slane %v1227, 2
        %v1229 = vadd.f32 %v1227, %v1228
        %v1230 = vrot.slane %v1229, 1
        %v1231 = vadd.f32 %v1229, %v1230
        %v1232 = vsel %vm1109, %v1187, 0.0
        %v1233 = vrot.slane %v1232, 4
        %v1234 = vadd.f32 %v1232, %v1233
        %v1235 = vrot.slane %v1234, 2
        %v1236 = vadd.f32 %v1234, %v1235
        %v1237 = vrot.slane %v1236, 1
        %v1238 = vadd.f32 %v1236, %v1237
        %v1239 = vsel %vm1109, %v1189, 0.0
        %v1240 = vrot.slane %v1239, 4
        %v1241 = vadd.f32 %v1239, %v1240
        %v1242 = vrot.slane %v1241, 2
        %v1243 = vadd.f32 %v1241, %v1242
        %v1244 = vrot.slane %v1243, 1
        %v1245 = vadd.f32 %v1243, %v1244
        %v1246 = vrcp.pop %v1196
        %v1247 = vrcp.pop %v1203
        %v1248 = vrcp.pop %v1210
        %v1249 = vrcp.pop %v1217
        %v1250 = vrcp.pop %v1224
        %v1251 = vrcp.pop %v1231
        %v1252 = vrcp.pop %v1238
        %v1253 = vrcp.pop %v1245
        %v1254 = vmul.f32 %v1175, %v1246
        %v1255 = vmul.f32 %v1177, %v1247
        %v1256 = vmul.f32 %v1179, %v1248
        %v1257 = vmul.f32 %v1181, %v1249
        %v1258 = vmul.f32 %v1183, %v1250
        %v1259 = vmul.f32 %v1185, %v1251
        %v1260 = vmul.f32 %v1187, %v1252
        %v1261 = vmul.f32 %v1189, %v1253
        %v1262 = vmul.f32 %v1027, %v1254
        %v1263 = vmul.f32 %v1034, %v1255
        %v1264 = vmul.f32 %v1041, %v1256
        %v1265 = vmul.f32 %v1048, %v1257
        %v1266 = vmul.f32 %v1055, %v1258
        %v1267 = vmul.f32 %v1062, %v1259
        %v1268 = vmul.f32 %v1069, %v1260
        %v1269 = vmul.f32 %v1076, %v1261
        %v1270 = vld [vmem:[%s16] sm:$0xff]
        %v1271 = vld [vmem:[%s16 + $0x8] sm:$0xff]
        %v1272 = vld [vmem:[%s16 + $0x10] sm:$0xff]
        %v1273 = vld [vmem:[%s16 + $0x18] sm:$0xff]
        %v1274 = vld [vmem:[%s16 + $0x20] sm:$0xff]
        %v1275 = vld [vmem:[%s16 + $0x28] sm:$0xff]
        %v1276 = vld [vmem:[%s16 + $0x30] sm:$0xff]
        %v1277 = vld [vmem:[%s16 + $0x38] sm:$0xff]
        %v1278 = vld [vmem:[%s16 + $0x40] sm:$0xff]
        %v1279 = vld [vmem:[%s16 + $0x48] sm:$0xff]
        %v1280 = vld [vmem:[%s16 + $0x50] sm:$0xff]
        %v1281 = vld [vmem:[%s16 + $0x58] sm:$0xff]
        %v1282 = vld [vmem:[%s16 + $0x60] sm:$0xff]
        %v1283 = vld [vmem:[%s16 + $0x68] sm:$0xff]
        %v1284 = vld [vmem:[%s16 + $0x70] sm:$0xff]
        %v1285 = vld [vmem:[%s16 + $0x78] sm:$0xff]
        %v1294 = vcombine.low %v1262, %v1263
        %v1295 = vcombine.low %v1264, %v1265
        %v1296 = vcombine.low %v1266, %v1267
        %v1297 = vcombine.low %v1268, %v1269
        %1302 = vmatprep.subr.mxu0 0.0
        %1303 = vmatpush1.msra.mxu0 %v1270
        %1304 = vmatprep.subr.mxu0 0.0
        %1305 = vmatpush1.msra.mxu0 %v1271
        %1306 = vmatprep.subr.mxu0 0.0
        %1307 = vmatpush1.msra.mxu0 %v1272
        %1308 = vmatprep.subr.mxu0 0.0
        %1309 = vmatpush1.msra.mxu0 %v1273
        %1310 = vmatprep.subr.mxu0 0.0
        %1311 = vmatpush1.msra.mxu0 %v1274
        %1312 = vmatprep.subr.mxu0 0.0
        %1313 = vmatpush1.msra.mxu0 %v1275
        %1314 = vmatprep.subr.mxu0 0.0
        %1315 = vmatpush1.msra.mxu0 %v1276
        %1316 = vmatprep.subr.mxu0 0.0
        %1317 = vmatpush1.msra.mxu0 %v1277
        %1318 = vmatprep.subr.mxu0 0.0
        %1319 = vmatpush1.msra.mxu0 %v1278
        %1320 = vmatprep.subr.mxu0 0.0
        %1321 = vmatpush1.msra.mxu0 %v1279
        %1322 = vmatprep.subr.mxu0 0.0
        %1323 = vmatpush1.msra.mxu0 %v1280
        %1324 = vmatprep.subr.mxu0 0.0
        %1325 = vmatpush1.msra.mxu0 %v1281
        %1326 = vmatprep.subr.mxu0 0.0
        %1327 = vmatpush1.msra.mxu0 %v1282
        %1328 = vmatprep.subr.mxu0 0.0
        %1329 = vmatpush1.msra.mxu0 %v1283
        %1330 = vmatprep.subr.mxu0 0.0
        %1331 = vmatpush1.msra.mxu0 %v1284
        %1332 = vmatprep.subr.mxu0 0.0
        %1333 = vmatpush1.msra.mxu0 %v1285
        %1334 = vmatprep.subr.mxu0 0.0
        %1335 = vmatpush1.msra.mxu0 0.0
        %1336 = vmatprep.subr.mxu0 0.0
        %1337 = vmatpush1.msra.mxu0 0.0
        %1338 = vmatprep.subr.mxu0 0.0
        %1339 = vmatpush1.msra.mxu0 0.0
        %1340 = vmatprep.subr.mxu0 0.0
        %1341 = vmatpush1.msra.mxu0 0.0
        %1342 = vmatprep.subr.mxu0 0.0
        %1343 = vmatpush1.msra.mxu0 0.0
        %1344 = vmatprep.subr.mxu0 0.0
        %1345 = vmatpush1.msra.mxu0 0.0
        %1346 = vmatprep.subr.mxu0 0.0
        %1347 = vmatpush1.msra.mxu0 0.0
        %1348 = vmatprep.subr.mxu0 0.0
        %1349 = vmatpush1.msra.mxu0 0.0
        %1350 = vmatprep.subr.mxu0 0.0
        %1351 = vmatpush1.msra.mxu0 0.0
        %1352 = vmatprep.subr.mxu0 0.0
        %1353 = vmatpush1.msra.mxu0 0.0
        %1354 = vmatprep.subr.mxu0 0.0
        %1355 = vmatpush1.msra.mxu0 0.0
        %1356 = vmatprep.subr.mxu0 0.0
        %1357 = vmatpush1.msra.mxu0 0.0
        %1358 = vmatprep.subr.mxu0 0.0
        %1359 = vmatpush1.msra.mxu0 0.0
        %1360 = vmatprep.subr.mxu0 0.0
        %1361 = vmatpush1.msra.mxu0 0.0
        %1362 = vmatprep.subr.mxu0 0.0
        %1363 = vmatpush1.msra.mxu0 0.0
        %1364 = vmatprep.subr.mxu0 0.0
        %1365 = vmatpush1.msra.mxu0 0.0
        %1366 = vmatprep.mubr.f32.mxu0 0.0
        %1367 = vmatmul.mubr.f32.gmra.mrb[0].mxu0 %v1294
        %v1368 = vpop.f32.mrb[0].mxu0
        %v1369 = vadd.f32 0.0, %v1368
        %v1370 = vpop.f32.mrb[0].mxu0
        %1371 = vmatprep.mubr.f32.mxu0 0.0
        %1372 = vmatmul.mubr.f32.gmra.mrb[0].mxu0 %v1295
        %v1373 = vpop.f32.mrb[0].mxu0
        %v1374 = vadd.f32 0.0, %v1373
        %v1375 = vpop.f32.mrb[0].mxu0
        %1376 = vmatprep.mubr.f32.mxu0 0.0
        %1377 = vmatmul.mubr.f32.gmra.mrb[0].mxu0 %v1296
        %v1378 = vpop.f32.mrb[0].mxu0
        %v1379 = vadd.f32 0.0, %v1378
        %v1380 = vpop.f32.mrb[0].mxu0
        %1381 = vmatprep.mubr.f32.mxu0 0.0
        %1382 = vmatmul.mubr.f32.gmra.mrb[0].mxu0 %v1297
        %v1383 = vpop.f32.mrb[0].mxu0
        %v1384 = vadd.f32 0.0, %v1383
        %v1385 = vpop.f32.mrb[0].mxu0
        %1386 = vdwg.mxu0
        %1387 = vrot.lane.b32.xlu0 %v772, 96
        %v1388 = vpop.permute.xlu0 %1387
        %1389 = vrot.lane.b32.xlu0 %v777, 96
        %v1390 = vpop.permute.xlu0 %1389
        %1391 = vrot.lane.b32.xlu0 %v782, 96
        %v1392 = vpop.permute.xlu0 %1391
        %1393 = vrot.lane.b32.xlu0 %v787, 96
        %v1394 = vpop.permute.xlu0 %1393
        %v1399 = vmul.f32 %v1369, %v1388
        %v1400 = vmul.f32 %v1374, %v1390
        %v1401 = vmul.f32 %v1379, %v1392
        %v1402 = vmul.f32 %v1384, %v1394
        %v1407 = vcombine.high %v1399, %v1399
        %v1408 = vcombine.high %v1400, %v1400
        %v1409 = vcombine.high %v1401, %v1401
        %v1410 = vcombine.high %v1402, %v1402
        %vm1415 = vcmask 257024
        %v1416 = vsel %vm1415, %v1399, 0.0
        %v1417 = vrot.slane %v1416, 4
        %v1418 = vadd.f32 %v1416, %v1417
        %v1419 = vrot.slane %v1418, 2
        %v1420 = vadd.f32 %v1418, %v1419
        %v1421 = vrot.slane %v1420, 1
        %v1422 = vadd.f32 %v1420, %v1421
        %v1423 = vsel %vm1415, %v1407, 0.0
        %v1424 = vrot.slane %v1423, 4
        %v1425 = vadd.f32 %v1423, %v1424
        %v1426 = vrot.slane %v1425, 2
        %v1427 = vadd.f32 %v1425, %v1426
        %v1428 = vrot.slane %v1427, 1
        %v1429 = vadd.f32 %v1427, %v1428
        %v1430 = vsel %vm1415, %v1400, 0.0
        %v1431 = vrot.slane %v1430, 4
        %v1432 = vadd.f32 %v1430, %v1431
        %v1433 = vrot.slane %v1432, 2
        %v1434 = vadd.f32 %v1432, %v1433
        %v1435 = vrot.slane %v1434, 1
        %v1436 = vadd.f32 %v1434, %v1435
        %v1437 = vsel %vm1415, %v1408, 0.0
        %v1438 = vrot.slane %v1437, 4
        %v1439 = vadd.f32 %v1437, %v1438
        %v1440 = vrot.slane %v1439, 2
        %v1441 = vadd.f32 %v1439, %v1440
        %v1442 = vrot.slane %v1441, 1
        %v1443 = vadd.f32 %v1441, %v1442
        %v1444 = vsel %vm1415, %v1401, 0.0
        %v1445 = vrot.slane %v1444, 4
        %v1446 = vadd.f32 %v1444, %v1445
        %v1447 = vrot.slane %v1446, 2
        %v1448 = vadd.f32 %v1446, %v1447
        %v1449 = vrot.slane %v1448, 1
        %v1450 = vadd.f32 %v1448, %v1449
        %v1451 = vsel %vm1415, %v1409, 0.0
        %v1452 = vrot.slane %v1451, 4
        %v1453 = vadd.f32 %v1451, %v1452
        %v1454 = vrot.slane %v1453, 2
        %v1455 = vadd.f32 %v1453, %v1454
        %v1456 = vrot.slane %v1455, 1
        %v1457 = vadd.f32 %v1455, %v1456
        %v1458 = vsel %vm1415, %v1402, 0.0
        %v1459 = vrot.slane %v1458, 4
        %v1460 = vadd.f32 %v1458, %v1459
        %v1461 = vrot.slane %v1460, 2
        %v1462 = vadd.f32 %v1460, %v1461
        %v1463 = vrot.slane %v1462, 1
        %v1464 = vadd.f32 %v1462, %v1463
        %v1465 = vsel %vm1415, %v1410, 0.0
        %v1466 = vrot.slane %v1465, 4
        %v1467 = vadd.f32 %v1465, %v1466
        %v1468 = vrot.slane %v1467, 2
        %v1469 = vadd.f32 %v1467, %v1468
        %v1470 = vrot.slane %v1469, 1
        %v1471 = vadd.f32 %v1469, %v1470
        %v1472 = vld [vmem:[%s6] sm:$0xff]
        %v1473 = vld [vmem:[%s6 + $0x8] sm:$0xff]
        %v1474 = vld [vmem:[%s6 + $0x10] sm:$0xff]
        %v1475 = vld [vmem:[%s6 + $0x18] sm:$0xff]
        %vm1484 = vcmask 1041409
        %v1485 = vsel %vm1484, %v1429, %v1422
        %vm1486 = vcmask 1042434
        %v1487 = vsel %vm1486, %v1436, %v1485
        %vm1488 = vcmask 1043459
        %v1489 = vsel %vm1488, %v1443, %v1487
        %vm1490 = vcmask 1044484
        %v1491 = vsel %vm1490, %v1450, %v1489
        %vm1492 = vcmask 1045509
        %v1493 = vsel %vm1492, %v1457, %v1491
        %vm1494 = vcmask 1046534
        %v1495 = vsel %vm1494, %v1464, %v1493
        %vm1496 = vcmask 1047559
        %v1497 = vsel %vm1496, %v1471, %v1495
        %v1498 = vsel %vm610, %v1497, 0
        %1500 = vmatprep.subr.mxu0 0.0
        %1501 = vmatpush1.msra.mxu0 %v1472
        %1502 = vmatprep.subr.mxu0 0.0
        %1503 = vmatpush1.msra.mxu0 %v1473
        %1504 = vmatprep.subr.mxu0 0.0
        %1505 = vmatpush1.msra.mxu0 %v1474
        %1506 = vmatprep.subr.mxu0 0.0
        %1507 = vmatpush1.msra.mxu0 %v1475
        %1508 = vmatprep.subr.mxu0 0.0
        %1509 = vmatpush1.msra.mxu0 0.0
        %1510 = vmatprep.subr.mxu0 0.0
        %1511 = vmatpush1.msra.mxu0 0.0
        %1512 = vmatprep.subr.mxu0 0.0
        %1513 = vmatpush1.msra.mxu0 0.0
        %1514 = vmatprep.subr.mxu0 0.0
        %1515 = vmatpush1.msra.mxu0 0.0
        %1516 = vmatprep.subr.mxu0 0.0
        %1517 = vmatpush1.msra.mxu0 0.0
        %1518 = vmatprep.subr.mxu0 0.0
        %1519 = vmatpush1.msra.mxu0 0.0
        %1520 = vmatprep.subr.mxu0 0.0
        %1521 = vmatpush1.msra.mxu0 0.0
        %1522 = vmatprep.subr.mxu0 0.0
        %1523 = vmatpush1.msra.mxu0 0.0
        %1524 = vmatprep.subr.mxu0 0.0
        %1525 = vmatpush1.msra.mxu0 0.0
        %1526 = vmatprep.subr.mxu0 0.0
        %1527 = vmatpush1.msra.mxu0 0.0
        %1528 = vmatprep.subr.mxu0 0.0
        %1529 = vmatpush1.msra.mxu0 0.0
        %1530 = vmatprep.subr.mxu0 0.0
        %1531 = vmatpush1.msra.mxu0 0.0
        %1532 = vmatprep.subr.mxu0 0.0
        %1533 = vmatpush1.msra.mxu0 0.0
        %1534 = vmatprep.subr.mxu0 0.0
        %1535 = vmatpush1.msra.mxu0 0.0
        %1536 = vmatprep.subr.mxu0 0.0
        %1537 = vmatpush1.msra.mxu0 0.0
        %1538 = vmatprep.subr.mxu0 0.0
        %1539 = vmatpush1.msra.mxu0 0.0
        %1540 = vmatprep.subr.mxu0 0.0
        %1541 = vmatpush1.msra.mxu0 0.0
        %1542 = vmatprep.subr.mxu0 0.0
        %1543 = vmatpush1.msra.mxu0 0.0
        %1544 = vmatprep.subr.mxu0 0.0
        %1545 = vmatpush1.msra.mxu0 0.0
        %1546 = vmatprep.subr.mxu0 0.0
        %1547 = vmatpush1.msra.mxu0 0.0
        %1548 = vmatprep.subr.mxu0 0.0
        %1549 = vmatpush1.msra.mxu0 0.0
        %1550 = vmatprep.subr.mxu0 0.0
        %1551 = vmatpush1.msra.mxu0 0.0
        %1552 = vmatprep.subr.mxu0 0.0
        %1553 = vmatpush1.msra.mxu0 0.0
        %1554 = vmatprep.subr.mxu0 0.0
        %1555 = vmatpush1.msra.mxu0 0.0
        %1556 = vmatprep.subr.mxu0 0.0
        %1557 = vmatpush1.msra.mxu0 0.0
        %1558 = vmatprep.subr.mxu0 0.0
        %1559 = vmatpush1.msra.mxu0 0.0
        %1560 = vmatprep.subr.mxu0 0.0
        %1561 = vmatpush1.msra.mxu0 0.0
        %1562 = vmatprep.subr.mxu0 0.0
        %1563 = vmatpush1.msra.mxu0 0.0
        %1564 = vmatprep.mubr.f32.mxu0 0.0
        %1565 = vmatmul.mubr.f32.gmra.mrb[0].mxu0 %v1498
        %v1566 = vpop.f32.mrb[0].mxu0
        %v1567 = vadd.f32 0.0, %v1566
        %v1568 = vpop.f32.mrb[0].mxu0
        %1569 = vdwg.mxu0
        %v1570 = vadd.f32 %v600, %v1567
        %v1571 = vld [vmem:[%s11] sm:$0x1]
        %v1572 = vld [vmem:[%s12] sm:$0x1]
        %v1573 = vsel %vm610, %v1570, 0.0
        %1574 = vadd.xlane.f32.xlu0 %v1573
        %v1575 = vpop.xlane.xlu0 %1574
        %v1576 = vrcp.pop 32.0
        %v1577 = vmul.f32 %v1575, %v1576
        %v1578 = vsub.f32 %v1570, %v1577
        %v1579 = vmul.f32 %v1578, %v1578
        %v1580 = vsel %vm610, %v1579, 0.0
        %1581 = vadd.xlane.f32.xlu0 %v1580
        %v1582 = vpop.xlane.xlu0 %1581
        %v1583 = vmul.f32 %v1582, 0.032258064
        %v1584 = vadd.f32 %v1583, 1e-06
        %v1585 = vrsqrt.pop %v1584
        %v1586 = vmul.f32 %v1584, %v1585
        %vm1587 = vcmp.eq.f32.partialorder %v1584, inf
        %v1588 = vsel %vm1587, %v1584, %v1586
        %vm1589 = vcmp.eq.f32.partialorder %v1584, 0.0
        %v1590 = vand.u32 %v1584, 2147483648
        %v1591 = vsel %vm1589, %v1590, %v1588
        %v1593 = vlaneseq
        %v1594 = vshrl.u32 %v1593, 7
        %v1595 = vsub.s32 0, %v1594
        %v1596 = vrot.slane %v1571, %v1595
        %v1598 = vmul.f32 %v1596, %v1578
        %v1599 = vadd.f32 %v1591, 1e-06
        %v1600 = vrcp.pop %v1599
        %v1601 = vmul.f32 %v1598, %v1600
        %v1603 = vlaneseq
        %v1604 = vshrl.u32 %v1603, 7
        %v1605 = vsub.s32 0, %v1604
        %v1606 = vrot.slane %v1572, %v1605
        %v1608 = vadd.f32 %v1601, %v1606
        %v1609 = vld [vmem:[%s7] sm:$0xff]
        %v1610 = vld [vmem:[%s7 + $0x8] sm:$0xff]
        %v1611 = vld [vmem:[%s7 + $0x10] sm:$0xff]
        %v1612 = vld [vmem:[%s7 + $0x18] sm:$0xff]
        %v1613 = vld [vmem:[%s8] sm:$0x1]
        %v1615 = vlaneseq
        %v1616 = vshrl.u32 %v1615, 7
        %v1617 = vsub.s32 0, %v1616
        %v1618 = vrot.slane %v1613, %v1617
        %v1621 = vsel %vm610, %v1608, 0
        %1623 = vmatprep.subr.mxu0 0.0
        %1624 = vmatpush1.msra.mxu0 %v1609
        %1625 = vmatprep.subr.mxu0 0.0
        %1626 = vmatpush1.msra.mxu0 %v1610
        %1627 = vmatprep.subr.mxu0 0.0
        %1628 = vmatpush1.msra.mxu0 %v1611
        %1629 = vmatprep.subr.mxu0 0.0
        %1630 = vmatpush1.msra.mxu0 %v1612
        %1631 = vmatprep.subr.mxu0 0.0
        %1632 = vmatpush1.msra.mxu0 0.0
        %1633 = vmatprep.subr.mxu0 0.0
        %1634 = vmatpush1.msra.mxu0 0.0
        %1635 = vmatprep.subr.mxu0 0.0
        %1636 = vmatpush1.msra.mxu0 0.0
        %1637 = vmatprep.subr.mxu0 0.0
        %1638 = vmatpush1.msra.mxu0 0.0
        %1639 = vmatprep.subr.mxu0 0.0
        %1640 = vmatpush1.msra.mxu0 0.0
        %1641 = vmatprep.subr.mxu0 0.0
        %1642 = vmatpush1.msra.mxu0 0.0
        %1643 = vmatprep.subr.mxu0 0.0
        %1644 = vmatpush1.msra.mxu0 0.0
        %1645 = vmatprep.subr.mxu0 0.0
        %1646 = vmatpush1.msra.mxu0 0.0
        %1647 = vmatprep.subr.mxu0 0.0
        %1648 = vmatpush1.msra.mxu0 0.0
        %1649 = vmatprep.subr.mxu0 0.0
        %1650 = vmatpush1.msra.mxu0 0.0
        %1651 = vmatprep.subr.mxu0 0.0
        %1652 = vmatpush1.msra.mxu0 0.0
        %1653 = vmatprep.subr.mxu0 0.0
        %1654 = vmatpush1.msra.mxu0 0.0
        %1655 = vmatprep.subr.mxu0 0.0
        %1656 = vmatpush1.msra.mxu0 0.0
        %1657 = vmatprep.subr.mxu0 0.0
        %1658 = vmatpush1.msra.mxu0 0.0
        %1659 = vmatprep.subr.mxu0 0.0
        %1660 = vmatpush1.msra.mxu0 0.0
        %1661 = vmatprep.subr.mxu0 0.0
        %1662 = vmatpush1.msra.mxu0 0.0
        %1663 = vmatprep.subr.mxu0 0.0
        %1664 = vmatpush1.msra.mxu0 0.0
        %1665 = vmatprep.subr.mxu0 0.0
        %1666 = vmatpush1.msra.mxu0 0.0
        %1667 = vmatprep.subr.mxu0 0.0
        %1668 = vmatpush1.msra.mxu0 0.0
        %1669 = vmatprep.subr.mxu0 0.0
        %1670 = vmatpush1.msra.mxu0 0.0
        %1671 = vmatprep.subr.mxu0 0.0
        %1672 = vmatpush1.msra.mxu0 0.0
        %1673 = vmatprep.subr.mxu0 0.0
        %1674 = vmatpush1.msra.mxu0 0.0
        %1675 = vmatprep.subr.mxu0 0.0
        %1676 = vmatpush1.msra.mxu0 0.0
        %1677 = vmatprep.subr.mxu0 0.0
        %1678 = vmatpush1.msra.mxu0 0.0
        %1679 = vmatprep.subr.mxu0 0.0
        %1680 = vmatpush1.msra.mxu0 0.0
        %1681 = vmatprep.subr.mxu0 0.0
        %1682 = vmatpush1.msra.mxu0 0.0
        %1683 = vmatprep.subr.mxu0 0.0
        %1684 = vmatpush1.msra.mxu0 0.0
        %1685 = vmatprep.subr.mxu0 0.0
        %1686 = vmatpush1.msra.mxu0 0.0
        %1687 = vmatprep.mubr.f32.mxu0 0.0
        %1688 = vmatmul.mubr.f32.gmra.mrb[0].mxu0 %v1621
        %v1689 = vpop.f32.mrb[0].mxu0
        %v1690 = vadd.f32 %v1618, %v1689
        %v1691 = vpop.f32.mrb[0].mxu0
        %1692 = vdwg.mxu0
        %v1693 = vmax.f32 %v1690, 0.0
        %v1694 = vld [vmem:[%s9] sm:$0xff]
        %v1695 = vld [vmem:[%s9 + $0x8] sm:$0xff]
        %v1696 = vld [vmem:[%s9 + $0x10] sm:$0xff]
        %v1697 = vld [vmem:[%s9 + $0x18] sm:$0xff]
        %v1698 = vld [vmem:[%s9 + $0x20] sm:$0xff]
        %v1699 = vld [vmem:[%s9 + $0x28] sm:$0xff]
        %v1700 = vld [vmem:[%s9 + $0x30] sm:$0xff]
        %v1701 = vld [vmem:[%s9 + $0x38] sm:$0xff]
        %v1702 = vld [vmem:[%s9 + $0x40] sm:$0xff]
        %v1703 = vld [vmem:[%s9 + $0x48] sm:$0xff]
        %v1704 = vld [vmem:[%s9 + $0x50] sm:$0xff]
        %v1705 = vld [vmem:[%s9 + $0x58] sm:$0xff]
        %v1706 = vld [vmem:[%s9 + $0x60] sm:$0xff]
        %v1707 = vld [vmem:[%s9 + $0x68] sm:$0xff]
        %v1708 = vld [vmem:[%s9 + $0x70] sm:$0xff]
        %v1709 = vld [vmem:[%s9 + $0x78] sm:$0xff]
        %v1710 = vld [vmem:[%s10] sm:$0x1]
        %v1712 = vlaneseq
        %v1713 = vshrl.u32 %v1712, 7
        %v1714 = vsub.s32 0, %v1713
        %v1715 = vrot.slane %v1710, %v1714
        %1717 = vmatprep.subr.mxu0 0.0
        %1718 = vmatpush1.msra.mxu0 %v1694
        %1719 = vmatprep.subr.mxu0 0.0
        %1720 = vmatpush1.msra.mxu0 %v1695
        %1721 = vmatprep.subr.mxu0 0.0
        %1722 = vmatpush1.msra.mxu0 %v1696
        %1723 = vmatprep.subr.mxu0 0.0
        %1724 = vmatpush1.msra.mxu0 %v1697
        %1725 = vmatprep.subr.mxu0 0.0
        %1726 = vmatpush1.msra.mxu0 %v1698
        %1727 = vmatprep.subr.mxu0 0.0
        %1728 = vmatpush1.msra.mxu0 %v1699
        %1729 = vmatprep.subr.mxu0 0.0
        %1730 = vmatpush1.msra.mxu0 %v1700
        %1731 = vmatprep.subr.mxu0 0.0
        %1732 = vmatpush1.msra.mxu0 %v1701
        %1733 = vmatprep.subr.mxu0 0.0
        %1734 = vmatpush1.msra.mxu0 %v1702
        %1735 = vmatprep.subr.mxu0 0.0
        %1736 = vmatpush1.msra.mxu0 %v1703
        %1737 = vmatprep.subr.mxu0 0.0
        %1738 = vmatpush1.msra.mxu0 %v1704
        %1739 = vmatprep.subr.mxu0 0.0
        %1740 = vmatpush1.msra.mxu0 %v1705
        %1741 = vmatprep.subr.mxu0 0.0
        %1742 = vmatpush1.msra.mxu0 %v1706
        %1743 = vmatprep.subr.mxu0 0.0
        %1744 = vmatpush1.msra.mxu0 %v1707
        %1745 = vmatprep.subr.mxu0 0.0
        %1746 = vmatpush1.msra.mxu0 %v1708
        %1747 = vmatprep.subr.mxu0 0.0
        %1748 = vmatpush1.msra.mxu0 %v1709
        %1749 = vmatprep.subr.mxu0 0.0
        %1750 = vmatpush1.msra.mxu0 0.0
        %1751 = vmatprep.subr.mxu0 0.0
        %1752 = vmatpush1.msra.mxu0 0.0
        %1753 = vmatprep.subr.mxu0 0.0
        %1754 = vmatpush1.msra.mxu0 0.0
        %1755 = vmatprep.subr.mxu0 0.0
        %1756 = vmatpush1.msra.mxu0 0.0
        %1757 = vmatprep.subr.mxu0 0.0
        %1758 = vmatpush1.msra.mxu0 0.0
        %1759 = vmatprep.subr.mxu0 0.0
        %1760 = vmatpush1.msra.mxu0 0.0
        %1761 = vmatprep.subr.mxu0 0.0
        %1762 = vmatpush1.msra.mxu0 0.0
        %1763 = vmatprep.subr.mxu0 0.0
        %1764 = vmatpush1.msra.mxu0 0.0
        %1765 = vmatprep.subr.mxu0 0.0
        %1766 = vmatpush1.msra.mxu0 0.0
        %1767 = vmatprep.subr.mxu0 0.0
        %1768 = vmatpush1.msra.mxu0 0.0
        %1769 = vmatprep.subr.mxu0 0.0
        %1770 = vmatpush1.msra.mxu0 0.0
        %1771 = vmatprep.subr.mxu0 0.0
        %1772 = vmatpush1.msra.mxu0 0.0
        %1773 = vmatprep.subr.mxu0 0.0
        %1774 = vmatpush1.msra.mxu0 0.0
        %1775 = vmatprep.subr.mxu0 0.0
        %1776 = vmatpush1.msra.mxu0 0.0
        %1777 = vmatprep.subr.mxu0 0.0
        %1778 = vmatpush1.msra.mxu0 0.0
        %1779 = vmatprep.subr.mxu0 0.0
        %1780 = vmatpush1.msra.mxu0 0.0
        %1781 = vmatprep.mubr.f32.mxu0 0.0
        %1782 = vmatmul.mubr.f32.gmra.mrb[0].mxu0 %v1693
        %v1783 = vpop.f32.mrb[0].mxu0
        %v1784 = vadd.f32 %v1715, %v1783
        %v1785 = vpop.f32.mrb[0].mxu0
        %1786 = vdwg.mxu0
        %v1787 = vadd.f32 %v1608, %v1784
        %v1788 = vld [vmem:[%s13] sm:$0x1]
        %v1789 = vld [vmem:[%s14] sm:$0x1]
        %v1790 = vsel %vm610, %v1787, 0.0
        %1791 = vadd.xlane.f32.xlu0 %v1790
        %v1792 = vpop.xlane.xlu0 %1791
        %v1793 = vmul.f32 %v1792, %v1576
        %v1794 = vsub.f32 %v1787, %v1793
        %v1795 = vmul.f32 %v1794, %v1794
        %v1796 = vsel %vm610, %v1795, 0.0
        %1797 = vadd.xlane.f32.xlu0 %v1796
        %v1798 = vpop.xlane.xlu0 %1797
        %v1799 = vmul.f32 %v1798, 0.032258064
        %v1800 = vadd.f32 %v1799, 1e-06
        %v1801 = vrsqrt.pop %v1800
        %v1802 = vmul.f32 %v1800, %v1801
        %vm1803 = vcmp.eq.f32.partialorder %v1800, inf
        %v1804 = vsel %vm1803, %v1800, %v1802
        %vm1805 = vcmp.eq.f32.partialorder %v1800, 0.0
        %v1806 = vand.u32 %v1800, 2147483648
        %v1807 = vsel %vm1805, %v1806, %v1804
        %v1809 = vlaneseq
        %v1810 = vshrl.u32 %v1809, 7
        %v1811 = vsub.s32 0, %v1810
        %v1812 = vrot.slane %v1788, %v1811
        %v1814 = vmul.f32 %v1812, %v1794
        %v1815 = vadd.f32 %v1807, 1e-06
        %v1816 = vrcp.pop %v1815
        %v1817 = vmul.f32 %v1814, %v1816
        %v1819 = vlaneseq
        %v1820 = vshrl.u32 %v1819, 7
        %v1821 = vsub.s32 0, %v1820
        %v1822 = vrot.slane %v1789, %v1821
        %v1824 = vadd.f32 %v1817, %v1822
        %v1825 = vld [vmem:[%s599] sm:$0xff]
        %1827 = vset.pattern.permute.xlu0 0
        %1828 = vperm.xlu0 %1827, %v1825
        %v1829 = vpop.permute.xlu0 %1828
        %v1831 = vmul.f32 %v1824, %v1829
        %1832 = vst.msk [vmem:[%s581] sm:$0xff] %vm610, %v1831
        %s1833 = sand.u32 %s416, 1
        %s1834 = scalar_lea.sflag [#allocation3], %s1833
        %s1835 = sand.u32 %s416, 1
        %s1836 = smul.addr %s1835, 8
        %s1837 = scalar_lea.vmem [#allocation2], %s1836
        // Predicated region
        $region89: #{tpu_custom_call.1} parent=87 // pred_check
          %p1838 = pneg %p426
        $region90: #{tpu_custom_call.1} parent=87 // pred_check_branch
          %1840 = sbr.rel (%p1838) target = $region92
        $region91: #{tpu_custom_call.1} parent=87 // pred_region
          %s1842 = ssub.s32 128, 128
          %1843 = vsyncadd %s1834, %s1842
          %s1844 = smul.addr %s31, 128
          %s1845 = scalar_lea.hbm %s17, %s1844
          %s1847 = sshll.u32 %s1837, 4
          %s1848 = int_to_ptr.vmem [resolvable:$true] %s1847
          %1850 = dma.vmem_to_hbm [thread:$0]  %s1848, 128, %s1845, %s1834
        $region92: #{tpu_custom_call.1} parent=87 // pred_fallthru
          _
      $region88: #{tpu_custom_call.1} parent=5 // pred_fallthru
        _
      %p1851 = scmp.le.s32.totalorder 2, %s26
      // Predicated region
      $region93: #{tpu_custom_call.1} parent=5 // pred_check
        %p1852 = pneg %p1851
      $region94: #{tpu_custom_call.1} parent=5 // pred_check_branch
        %1854 = sbr.rel (%p1852) target = $region96
      $region95: #{tpu_custom_call.1} parent=5 // pred_region
        %s1855 = ssub.s32 %s26, 2
        // Predicated region
        $region97: #{tpu_custom_call.1} parent=95 // pred_check
          %p1856 = pneg %p432
        $region98: #{tpu_custom_call.1} parent=95 // pred_check_branch
          %1858 = sbr.rel (%p1856) target = $region100
        $region99: #{tpu_custom_call.1} parent=95 // pred_region
          %s1859 = sand.u32 %s417, 1
          %s1860 = scalar_lea.sflag [#allocation3], %s1859
          %s1861 = sand.u32 %s417, 1
          %s1862 = smul.addr %s1861, 8
          %s1863 = scalar_lea.vmem [#allocation2], %s1862
          %1864 = dma.done %s1860, 128
        $region100: #{tpu_custom_call.1} parent=95 // pred_fallthru
          _
      $region96: #{tpu_custom_call.1} parent=5 // pred_fallthru
        _
    $region6: #{tpu_custom_call.1} parent=1 // loop_footer
      %s30 = sadd.s32 1, %s26
    $region7: #{tpu_custom_call.1} parent=1 // loop_footer_branch
      %25 = sbr.rel target = $region3
    $region8: #{tpu_custom_call.1} parent=1 // loop_exit
      _
    %1865 = vsyncpa [#allocation3], 1
    %s1866 = scalar_lea.sflag [#allocation3], 1
    %1867 = vsyncpa %s1866, 1

</llo_original>
